<compile_context>
chip_gen: v5e
topology: v5e:2x2
jax: 0.10.0
libtpu: 0.0.40
codegen_flags: <defaults>
</compile_context>

<pallas_src>
import functools

import jax
import jax.numpy as jnp
from jax.experimental import pallas as pl
from jax.experimental.pallas import tpu as pltpu

LANE = 128  # lane width of the packed weight slab and of the output store


def _pad8(n):
    return -(-n // 8) * 8


def _slab_layout(D0, H0, H1, L0):
    """Row offsets of every weight/bias section inside the packed (rows, 128)
    f32 slab.  Every section starts on an 8-row (sublane-tile) boundary so the
    in-kernel static slices stay tile aligned."""
    sections = [("wx0", D0), ("wh0", H0), ("b0", 1),
                ("wx1", H0), ("wh1", H1), ("b1", 1),
                ("wl0", H1), ("bl0", 1), ("wl1", L0), ("bl1", 1)]
    offs, r = {}, 0
    for name, rows in sections:
        offs[name] = (r, rows)
        r += _pad8(rows)
    return offs, r


# ---------------------------------------------------------------------------
# Fused kernel: GRU0 -> GRU1 (wavefronted) -> Linear0 -> Linear1(+lane pad)
#   x_ref   : (B, T, D0)  batch-first, exactly as the module receives it
#   w_ref   : (rows, 128) packed slab:
#             wx_l (Din,128) = [W_ir | W_iz | W_in | 0    ]
#             wh_l (H,  128) = [W_hr | W_hz | W_hn | W_hn ]
#             b_l  (1,  128) = [bi_r+bh_r | bi_z+bh_z | bi_n+bh_n | bh_n]
#             wl0  (H1, 128) cols 0:L0 ; bl0 (1,128) cols 0:L0
#             wl1  (L0, 128) cols 0:OUT; bl1 (1,128) cols 0:OUT
#   out_ref : (B, 128) lane-dense, cols 0:OUT valid
# ---------------------------------------------------------------------------
def fused_classifier_gru_kernel(x_ref, w_ref, out_ref, *,
                                T, B, D0, H0, H1, L0, apply_relu, offs):
    f32 = jnp.float32
    # NOTE: on v6e/v7x the matmul operands below could be cast to bf16 (keeping
    # preferred_element_type=f32) to cut MXU passes ~3x; kept f32 for exactness.

    def sec(name):
        r0, n = offs[name]
        return w_ref[r0:r0 + n, :]          # static, tile-aligned slab slice

    wx0, wh0 = sec("wx0"), sec("wh0")
    wx1, wh1 = sec("wx1"), sec("wh1")
    wl0, wl1 = sec("wl0"), sec("wl1")
    bl0, bl1 = sec("bl0"), sec("bl1")
    b0 = jnp.broadcast_to(sec("b0"), (B, LANE))     # broadcast once, outside the loop
    b1 = jnp.broadcast_to(sec("b1"), (B, LANE))

    relu = (lambda v: jnp.maximum(v, 0.0)) if apply_relu else (lambda v: v)

    def gru_step(inp_t, h, wx, wh, b, H):
        # One 128-lane gate result: [gx+gh for r|z|n | gh_n].  Only the h-side
        # dot sits on the recurrence critical path; the inp-side dot is free to
        # be scheduled early.
        g = (jnp.dot(inp_t, wx, preferred_element_type=f32)
             + jnp.dot(h, wh, preferred_element_type=f32) + b)          # (B, 4H)
        rz = jax.nn.sigmoid(g[:, 0:2 * H])                              # 1 EUP pass for r & z
        r, z = rz[:, 0:H], rz[:, H:2 * H]
        ghn = g[:, 3 * H:4 * H]                                         # h @ W_hn + b_hn
        n = jnp.tanh(g[:, 2 * H:3 * H] + (r - 1.0) * ghn)               # == tanh(gx_n + bi_n + r*gh_n)
        return (1.0 - z) * n + z * h                                    # raw recurrent carry

    x_all = x_ref[...]                                                  # (B, T, D0), single load
    h0 = jnp.zeros((B, H0), f32)
    h1 = jnp.zeros((B, H1), f32)
    # Static unroll, wavefronted: layer-1 step t only depends on layer-0 step t,
    # so layer-0 step t+1 overlaps layer-1 step t in the schedule.
    for t in range(T):
        x_t = x_all[:, t, :]                                            # (B, D0)
        h0 = gru_step(x_t, h0, wx0, wh0, b0, H0)
        h1 = gru_step(relu(h0), h1, wx1, wh1, b1, H1)                   # ReLU only on the output seq

    # Only the last timestep of layer-1's (ReLU'd) output sequence is consumed.
    last = relu(h1)                                                     # (B, H1)
    # F.dropout(training=False) == identity.
    y = relu(jnp.dot(last, wl0, preferred_element_type=f32) + bl0)      # (B,128), lanes >= L0 are 0
    y = relu(jnp.dot(y[:, 0:L0], wl1, preferred_element_type=f32) + bl1)
    out_ref[...] = y                                                    # single lane-dense store


# ---------------------------------------------------------------------------
# Wrapper: packs everything into one slab and calls the fused kernel once.
# No boundary transpose: input stays batch-first.
# ---------------------------------------------------------------------------
CFG = {
    "rnn_layers": [1, 1],
    "rnn_io": [[16, 32], [32, 32]],
    "linear_io": [[32, 16], [16, 8]],
    "activ": True,
    "dropout": True,
}


def _pack_gru_blocks(p):
    # p["w_ih"]: (3, Din, H), p["w_hh"]: (3, H, H), biases (3, 1, H); gates (r,z,n).
    w_ih, w_hh, b_ih, b_hh = p["w_ih"], p["w_hh"], p["b_ih"], p["b_hh"]
    Din, H = w_ih.shape[1], w_ih.shape[2]
    wx = jnp.concatenate([w_ih[0], w_ih[1], w_ih[2],
                          jnp.zeros((Din, H), jnp.float32)], axis=1)     # (Din, 4H)
    wh = jnp.concatenate([w_hh[0], w_hh[1], w_hh[2], w_hh[2]], axis=1)   # (H, 4H)
    b = jnp.concatenate([b_ih[0] + b_hh[0], b_ih[1] + b_hh[1],
                         b_ih[2] + b_hh[2], b_hh[2]], axis=1)            # (1, 4H)
    return wx, wh, b


def classifier_gru_forward(params, input_seqs, cfg, training=False):
    # TODO(synk): training-mode dropout (random mask) not implemented; inference path only.
    B, T, D0 = input_seqs.shape
    H0, H1 = cfg["rnn_io"][0][1], cfg["rnn_io"][1][1]
    L0, OUT = cfg["linear_io"][0][1], cfg["linear_io"][1][1]
    assert 4 * H0 == LANE and 4 * H1 == LANE, "packed gate layout assumes H == 32"

    offs, rows = _slab_layout(D0, H0, H1, L0)
    wx0, wh0, b0 = _pack_gru_blocks(params["gru"][0])
    wx1, wh1, b1 = _pack_gru_blocks(params["gru"][1])
    slab = jnp.zeros((rows, LANE), jnp.float32)
    for name, mat in (("wx0", wx0), ("wh0", wh0), ("b0", b0),
                      ("wx1", wx1), ("wh1", wh1), ("b1", b1),
                      ("wl0", params["lin"][0]["w"]), ("bl0", params["lin"][0]["b"]),
                      ("wl1", params["lin"][1]["w"]), ("bl1", params["lin"][1]["b"])):
        r0, _ = offs[name]
        slab = slab.at[r0:r0 + mat.shape[0], 0:mat.shape[1]].set(mat)

    vmem = pl.BlockSpec(memory_space=pltpu.MemorySpace.VMEM)
    out_pad = pl.pallas_call(
        functools.partial(fused_classifier_gru_kernel,
                          T=T, B=B, D0=D0, H0=H0, H1=H1, L0=L0,
                          apply_relu=cfg["activ"], offs=offs),
        out_shape=jax.ShapeDtypeStruct((B, LANE), jnp.float32),
        in_specs=[vmem, vmem],          # 2 DMAs total: input + packed weight slab
        out_specs=vmem,
        # NOTE: grid-less single call (B=2, latency path).  For throughput,
        # batch more sequences and add a batch-tile grid with
        # dimension_semantics=("parallel",) — on v7x this also engages the
        # second TensorCore; size tiles against v7x's 64 MiB VMEM (32 MiB
        # scoped default), not v6e's 128 MiB.
    )(input_seqs.astype(jnp.float32), slab)
    return out_pad[:, :OUT]


# ---------------------------------------------------------------------------
# Parameter init (PyTorch-style uniform) and pure-JAX reference.
# ---------------------------------------------------------------------------
def init_params(key, cfg):
    params = {"gru": [], "lin": []}
    for (d_in, h) in cfg["rnn_io"]:
        key, k1, k2, k3, k4 = jax.random.split(key, 5)
        s = 1.0 / jnp.sqrt(h)
        params["gru"].append(dict(
            w_ih=jax.random.uniform(k1, (3, d_in, h), jnp.float32, -s, s),
            w_hh=jax.random.uniform(k2, (3, h, h), jnp.float32, -s, s),
            b_ih=jax.random.uniform(k3, (3, 1, h), jnp.float32, -s, s),
            b_hh=jax.random.uniform(k4, (3, 1, h), jnp.float32, -s, s),
        ))
    for (d_in, d_out) in cfg["linear_io"]:
        key, k1, k2 = jax.random.split(key, 3)
        s = 1.0 / jnp.sqrt(d_in)
        params["lin"].append(dict(
            w=jax.random.uniform(k1, (d_in, d_out), jnp.float32, -s, s),
            b=jax.random.uniform(k2, (1, d_out), jnp.float32, -s, s),
        ))
    return params


def reference_forward(params, x, cfg):
    h = x
    for p in params["gru"]:
        B, T, _ = h.shape
        H = p["w_hh"].shape[1]
        hh = jnp.zeros((B, H), jnp.float32)
        outs = []
        for t in range(T):
            xt = h[:, t, :]
            r = jax.nn.sigmoid(xt @ p["w_ih"][0] + p["b_ih"][0] + hh @ p["w_hh"][0] + p["b_hh"][0])
            z = jax.nn.sigmoid(xt @ p["w_ih"][1] + p["b_ih"][1] + hh @ p["w_hh"][1] + p["b_hh"][1])
            n = jnp.tanh(xt @ p["w_ih"][2] + p["b_ih"][2] + r * (hh @ p["w_hh"][2] + p["b_hh"][2]))
            hh = (1.0 - z) * n + z * hh
            outs.append(hh)
        h = jnp.stack(outs, axis=1)
        if cfg["activ"]:
            h = jnp.maximum(h, 0.0)
    h = h[:, -1, :]
    for p in params["lin"]:
        h = h @ p["w"] + p["b"]
        if cfg["activ"]:
            h = jnp.maximum(h, 0.0)
    return h


if __name__ == "__main__":
    key = jax.random.PRNGKey(0)
    k_params, k_x = jax.random.split(key)

    B, T, D = 2, 8, CFG["rnn_io"][0][0]
    x = jax.random.normal(k_x, (B, T, D), jnp.float32)                   # (B, T, D), batch-first
    params = init_params(k_params, CFG)

    out = classifier_gru_forward(params, x, CFG, training=False)
    out = jax.block_until_ready(out)

    ref = reference_forward(params, x, CFG)
    assert out.shape == (B, CFG["linear_io"][-1][1])
    assert jnp.allclose(out, ref, atol=1e-5, rtol=1e-5), "Pallas output mismatch vs reference"

    print("KERNEL_OK")
</pallas_src>

<mosaic_0001>
module attributes {stable_mosaic.version = 11 : i64} {
  func.func @fused_classifier_gru_kernel(%arg0: memref<2x8x16xf32, #tpu.memory_space<vmem>>, %arg1: memref<192x128xf32, #tpu.memory_space<vmem>>, %arg2: memref<2x128xf32, #tpu.memory_space<vmem>>) attributes {dimension_semantics = [], scalar_prefetch = 0 : i64, scratch_operands = 0 : i64, tpu.core_type = #tpu.core_type<tc>} {
    %c0 = arith.constant 0 : index
    %c0_0 = arith.constant 0 : index
    %0 = vector.load %arg1[%c0, %c0_0] : memref<192x128xf32, #tpu.memory_space<vmem>>, vector<16x128xf32>
    %c16 = arith.constant 16 : index
    %c0_1 = arith.constant 0 : index
    %1 = vector.load %arg1[%c16, %c0_1] : memref<192x128xf32, #tpu.memory_space<vmem>>, vector<32x128xf32>
    %c56 = arith.constant 56 : index
    %c0_2 = arith.constant 0 : index
    %2 = vector.load %arg1[%c56, %c0_2] : memref<192x128xf32, #tpu.memory_space<vmem>>, vector<32x128xf32>
    %c88 = arith.constant 88 : index
    %c0_3 = arith.constant 0 : index
    %3 = vector.load %arg1[%c88, %c0_3] : memref<192x128xf32, #tpu.memory_space<vmem>>, vector<32x128xf32>
    %c128 = arith.constant 128 : index
    %c0_4 = arith.constant 0 : index
    %4 = vector.load %arg1[%c128, %c0_4] : memref<192x128xf32, #tpu.memory_space<vmem>>, vector<32x128xf32>
    %c168 = arith.constant 168 : index
    %c0_5 = arith.constant 0 : index
    %5 = vector.load %arg1[%c168, %c0_5] : memref<192x128xf32, #tpu.memory_space<vmem>>, vector<16x128xf32>
    %c160 = arith.constant 160 : index
    %c0_6 = arith.constant 0 : index
    %6 = vector.load %arg1[%c160, %c0_6] : memref<192x128xf32, #tpu.memory_space<vmem>>, vector<1x128xf32>
    %c184 = arith.constant 184 : index
    %c0_7 = arith.constant 0 : index
    %7 = vector.load %arg1[%c184, %c0_7] : memref<192x128xf32, #tpu.memory_space<vmem>>, vector<1x128xf32>
    %c48 = arith.constant 48 : index
    %c0_8 = arith.constant 0 : index
    %8 = vector.load %arg1[%c48, %c0_8] : memref<192x128xf32, #tpu.memory_space<vmem>>, vector<1x128xf32>
    %9 = vector.shape_cast %8 : vector<1x128xf32> to vector<1x128xf32>
    %10 = vector.broadcast %9 : vector<1x128xf32> to vector<2x128xf32>
    %c120 = arith.constant 120 : index
    %c0_9 = arith.constant 0 : index
    %11 = vector.load %arg1[%c120, %c0_9] : memref<192x128xf32, #tpu.memory_space<vmem>>, vector<1x128xf32>
    %12 = vector.shape_cast %11 : vector<1x128xf32> to vector<1x128xf32>
    %13 = vector.broadcast %12 : vector<1x128xf32> to vector<2x128xf32>
    %c0_10 = arith.constant 0 : index
    %c0_11 = arith.constant 0 : index
    %c0_12 = arith.constant 0 : index
    %14 = vector.load %arg0[%c0_10, %c0_11, %c0_12] : memref<2x8x16xf32, #tpu.memory_space<vmem>>, vector<2x8x16xf32>
    %cst = arith.constant 0.000000e+00 : f32
    %15 = vector.broadcast %cst : f32 to vector<2x32xf32>
    %cst_13 = arith.constant 0.000000e+00 : f32
    %16 = vector.broadcast %cst_13 : f32 to vector<2x32xf32>
    %17 = vector.extract_strided_slice %14 {offsets = [0, 0, 0], sizes = [2, 1, 16], strides = [1, 1, 1]} : vector<2x8x16xf32> to vector<2x1x16xf32>
    %18 = vector.shape_cast %17 : vector<2x1x16xf32> to vector<2x16xf32>
    %cst_14 = arith.constant dense<0.000000e+00> : vector<2x128xf32>
    %19 = tpu.matmul %18, %0, %cst_14 {dimension_numbers = #tpu.dot_dimension_numbers<[1], [0], [0], [1], [0, 0, 1, 1], [], []>} : vector<2x16xf32>, vector<16x128xf32>, vector<2x128xf32> -> vector<2x128xf32>
    %cst_15 = arith.constant dense<0.000000e+00> : vector<2x128xf32>
    %20 = tpu.matmul %15, %1, %cst_15 {dimension_numbers = #tpu.dot_dimension_numbers<[1], [0], [0], [1], [0, 0, 1, 1], [], []>} : vector<2x32xf32>, vector<32x128xf32>, vector<2x128xf32> -> vector<2x128xf32>
    %21 = arith.addf %19, %20 : vector<2x128xf32>
    %22 = arith.addf %21, %10 : vector<2x128xf32>
    %23 = vector.extract_strided_slice %22 {offsets = [0, 0], sizes = [2, 64], strides = [1, 1]} : vector<2x128xf32> to vector<2x64xf32>
    %24 = arith.negf %23 : vector<2x64xf32>
    %25 = math.exp %24 : vector<2x64xf32>
    %cst_16 = arith.constant 1.000000e+00 : f32
    %26 = vector.broadcast %cst_16 : f32 to vector<2x64xf32>
    %27 = arith.addf %26, %25 : vector<2x64xf32>
    %28 = arith.divf %26, %27 : vector<2x64xf32>
    %29 = vector.extract_strided_slice %28 {offsets = [0, 0], sizes = [2, 32], strides = [1, 1]} : vector<2x64xf32> to vector<2x32xf32>
    %30 = vector.extract_strided_slice %28 {offsets = [0, 32], sizes = [2, 32], strides = [1, 1]} : vector<2x64xf32> to vector<2x32xf32>
    %31 = vector.extract_strided_slice %22 {offsets = [0, 96], sizes = [2, 32], strides = [1, 1]} : vector<2x128xf32> to vector<2x32xf32>
    %32 = vector.extract_strided_slice %22 {offsets = [0, 64], sizes = [2, 32], strides = [1, 1]} : vector<2x128xf32> to vector<2x32xf32>
    %cst_17 = arith.constant 1.000000e+00 : f32
    %33 = vector.broadcast %cst_17 : f32 to vector<2x32xf32>
    %34 = arith.subf %29, %33 : vector<2x32xf32>
    %35 = arith.mulf %34, %31 : vector<2x32xf32>
    %36 = arith.addf %32, %35 : vector<2x32xf32>
    %37 = math.tanh %36 : vector<2x32xf32>
    %cst_18 = arith.constant 1.000000e+00 : f32
    %38 = vector.broadcast %cst_18 : f32 to vector<2x32xf32>
    %39 = arith.subf %38, %30 : vector<2x32xf32>
    %40 = arith.mulf %39, %37 : vector<2x32xf32>
    %41 = arith.mulf %30, %15 : vector<2x32xf32>
    %42 = arith.addf %40, %41 : vector<2x32xf32>
    %cst_19 = arith.constant 0.000000e+00 : f32
    %43 = vector.broadcast %cst_19 : f32 to vector<2x32xf32>
    %44 = arith.maximumf %42, %43 : vector<2x32xf32>
    %cst_20 = arith.constant dense<0.000000e+00> : vector<2x128xf32>
    %45 = tpu.matmul %44, %2, %cst_20 {dimension_numbers = #tpu.dot_dimension_numbers<[1], [0], [0], [1], [0, 0, 1, 1], [], []>} : vector<2x32xf32>, vector<32x128xf32>, vector<2x128xf32> -> vector<2x128xf32>
    %cst_21 = arith.constant dense<0.000000e+00> : vector<2x128xf32>
    %46 = tpu.matmul %16, %3, %cst_21 {dimension_numbers = #tpu.dot_dimension_numbers<[1], [0], [0], [1], [0, 0, 1, 1], [], []>} : vector<2x32xf32>, vector<32x128xf32>, vector<2x128xf32> -> vector<2x128xf32>
    %47 = arith.addf %45, %46 : vector<2x128xf32>
    %48 = arith.addf %47, %13 : vector<2x128xf32>
    %49 = vector.extract_strided_slice %48 {offsets = [0, 0], sizes = [2, 64], strides = [1, 1]} : vector<2x128xf32> to vector<2x64xf32>
    %50 = arith.negf %49 : vector<2x64xf32>
    %51 = math.exp %50 : vector<2x64xf32>
    %cst_22 = arith.constant 1.000000e+00 : f32
    %52 = vector.broadcast %cst_22 : f32 to vector<2x64xf32>
    %53 = arith.addf %52, %51 : vector<2x64xf32>
    %54 = arith.divf %52, %53 : vector<2x64xf32>
    %55 = vector.extract_strided_slice %54 {offsets = [0, 0], sizes = [2, 32], strides = [1, 1]} : vector<2x64xf32> to vector<2x32xf32>
    %56 = vector.extract_strided_slice %54 {offsets = [0, 32], sizes = [2, 32], strides = [1, 1]} : vector<2x64xf32> to vector<2x32xf32>
    %57 = vector.extract_strided_slice %48 {offsets = [0, 96], sizes = [2, 32], strides = [1, 1]} : vector<2x128xf32> to vector<2x32xf32>
    %58 = vector.extract_strided_slice %48 {offsets = [0, 64], sizes = [2, 32], strides = [1, 1]} : vector<2x128xf32> to vector<2x32xf32>
    %cst_23 = arith.constant 1.000000e+00 : f32
    %59 = vector.broadcast %cst_23 : f32 to vector<2x32xf32>
    %60 = arith.subf %55, %59 : vector<2x32xf32>
    %61 = arith.mulf %60, %57 : vector<2x32xf32>
    %62 = arith.addf %58, %61 : vector<2x32xf32>
    %63 = math.tanh %62 : vector<2x32xf32>
    %cst_24 = arith.constant 1.000000e+00 : f32
    %64 = vector.broadcast %cst_24 : f32 to vector<2x32xf32>
    %65 = arith.subf %64, %56 : vector<2x32xf32>
    %66 = arith.mulf %65, %63 : vector<2x32xf32>
    %67 = arith.mulf %56, %16 : vector<2x32xf32>
    %68 = arith.addf %66, %67 : vector<2x32xf32>
    %69 = vector.extract_strided_slice %14 {offsets = [0, 1, 0], sizes = [2, 1, 16], strides = [1, 1, 1]} : vector<2x8x16xf32> to vector<2x1x16xf32>
    %70 = vector.shape_cast %69 : vector<2x1x16xf32> to vector<2x16xf32>
    %cst_25 = arith.constant dense<0.000000e+00> : vector<2x128xf32>
    %71 = tpu.matmul %70, %0, %cst_25 {dimension_numbers = #tpu.dot_dimension_numbers<[1], [0], [0], [1], [0, 0, 1, 1], [], []>} : vector<2x16xf32>, vector<16x128xf32>, vector<2x128xf32> -> vector<2x128xf32>
    %cst_26 = arith.constant dense<0.000000e+00> : vector<2x128xf32>
    %72 = tpu.matmul %42, %1, %cst_26 {dimension_numbers = #tpu.dot_dimension_numbers<[1], [0], [0], [1], [0, 0, 1, 1], [], []>} : vector<2x32xf32>, vector<32x128xf32>, vector<2x128xf32> -> vector<2x128xf32>
    %73 = arith.addf %71, %72 : vector<2x128xf32>
    %74 = arith.addf %73, %10 : vector<2x128xf32>
    %75 = vector.extract_strided_slice %74 {offsets = [0, 0], sizes = [2, 64], strides = [1, 1]} : vector<2x128xf32> to vector<2x64xf32>
    %76 = arith.negf %75 : vector<2x64xf32>
    %77 = math.exp %76 : vector<2x64xf32>
    %cst_27 = arith.constant 1.000000e+00 : f32
    %78 = vector.broadcast %cst_27 : f32 to vector<2x64xf32>
    %79 = arith.addf %78, %77 : vector<2x64xf32>
    %80 = arith.divf %78, %79 : vector<2x64xf32>
    %81 = vector.extract_strided_slice %80 {offsets = [0, 0], sizes = [2, 32], strides = [1, 1]} : vector<2x64xf32> to vector<2x32xf32>
    %82 = vector.extract_strided_slice %80 {offsets = [0, 32], sizes = [2, 32], strides = [1, 1]} : vector<2x64xf32> to vector<2x32xf32>
    %83 = vector.extract_strided_slice %74 {offsets = [0, 96], sizes = [2, 32], strides = [1, 1]} : vector<2x128xf32> to vector<2x32xf32>
    %84 = vector.extract_strided_slice %74 {offsets = [0, 64], sizes = [2, 32], strides = [1, 1]} : vector<2x128xf32> to vector<2x32xf32>
    %cst_28 = arith.constant 1.000000e+00 : f32
    %85 = vector.broadcast %cst_28 : f32 to vector<2x32xf32>
    %86 = arith.subf %81, %85 : vector<2x32xf32>
    %87 = arith.mulf %86, %83 : vector<2x32xf32>
    %88 = arith.addf %84, %87 : vector<2x32xf32>
    %89 = math.tanh %88 : vector<2x32xf32>
    %cst_29 = arith.constant 1.000000e+00 : f32
    %90 = vector.broadcast %cst_29 : f32 to vector<2x32xf32>
    %91 = arith.subf %90, %82 : vector<2x32xf32>
    %92 = arith.mulf %91, %89 : vector<2x32xf32>
    %93 = arith.mulf %82, %42 : vector<2x32xf32>
    %94 = arith.addf %92, %93 : vector<2x32xf32>
    %cst_30 = arith.constant 0.000000e+00 : f32
    %95 = vector.broadcast %cst_30 : f32 to vector<2x32xf32>
    %96 = arith.maximumf %94, %95 : vector<2x32xf32>
    %cst_31 = arith.constant dense<0.000000e+00> : vector<2x128xf32>
    %97 = tpu.matmul %96, %2, %cst_31 {dimension_numbers = #tpu.dot_dimension_numbers<[1], [0], [0], [1], [0, 0, 1, 1], [], []>} : vector<2x32xf32>, vector<32x128xf32>, vector<2x128xf32> -> vector<2x128xf32>
    %cst_32 = arith.constant dense<0.000000e+00> : vector<2x128xf32>
    %98 = tpu.matmul %68, %3, %cst_32 {dimension_numbers = #tpu.dot_dimension_numbers<[1], [0], [0], [1], [0, 0, 1, 1], [], []>} : vector<2x32xf32>, vector<32x128xf32>, vector<2x128xf32> -> vector<2x128xf32>
    %99 = arith.addf %97, %98 : vector<2x128xf32>
    %100 = arith.addf %99, %13 : vector<2x128xf32>
    %101 = vector.extract_strided_slice %100 {offsets = [0, 0], sizes = [2, 64], strides = [1, 1]} : vector<2x128xf32> to vector<2x64xf32>
    %102 = arith.negf %101 : vector<2x64xf32>
    %103 = math.exp %102 : vector<2x64xf32>
    %cst_33 = arith.constant 1.000000e+00 : f32
    %104 = vector.broadcast %cst_33 : f32 to vector<2x64xf32>
    %105 = arith.addf %104, %103 : vector<2x64xf32>
    %106 = arith.divf %104, %105 : vector<2x64xf32>
    %107 = vector.extract_strided_slice %106 {offsets = [0, 0], sizes = [2, 32], strides = [1, 1]} : vector<2x64xf32> to vector<2x32xf32>
    %108 = vector.extract_strided_slice %106 {offsets = [0, 32], sizes = [2, 32], strides = [1, 1]} : vector<2x64xf32> to vector<2x32xf32>
    %109 = vector.extract_strided_slice %100 {offsets = [0, 96], sizes = [2, 32], strides = [1, 1]} : vector<2x128xf32> to vector<2x32xf32>
    %110 = vector.extract_strided_slice %100 {offsets = [0, 64], sizes = [2, 32], strides = [1, 1]} : vector<2x128xf32> to vector<2x32xf32>
    %cst_34 = arith.constant 1.000000e+00 : f32
    %111 = vector.broadcast %cst_34 : f32 to vector<2x32xf32>
    %112 = arith.subf %107, %111 : vector<2x32xf32>
    %113 = arith.mulf %112, %109 : vector<2x32xf32>
    %114 = arith.addf %110, %113 : vector<2x32xf32>
    %115 = math.tanh %114 : vector<2x32xf32>
    %cst_35 = arith.constant 1.000000e+00 : f32
    %116 = vector.broadcast %cst_35 : f32 to vector<2x32xf32>
    %117 = arith.subf %116, %108 : vector<2x32xf32>
    %118 = arith.mulf %117, %115 : vector<2x32xf32>
    %119 = arith.mulf %108, %68 : vector<2x32xf32>
    %120 = arith.addf %118, %119 : vector<2x32xf32>
    %121 = vector.extract_strided_slice %14 {offsets = [0, 2, 0], sizes = [2, 1, 16], strides = [1, 1, 1]} : vector<2x8x16xf32> to vector<2x1x16xf32>
    %122 = vector.shape_cast %121 : vector<2x1x16xf32> to vector<2x16xf32>
    %cst_36 = arith.constant dense<0.000000e+00> : vector<2x128xf32>
    %123 = tpu.matmul %122, %0, %cst_36 {dimension_numbers = #tpu.dot_dimension_numbers<[1], [0], [0], [1], [0, 0, 1, 1], [], []>} : vector<2x16xf32>, vector<16x128xf32>, vector<2x128xf32> -> vector<2x128xf32>
    %cst_37 = arith.constant dense<0.000000e+00> : vector<2x128xf32>
    %124 = tpu.matmul %94, %1, %cst_37 {dimension_numbers = #tpu.dot_dimension_numbers<[1], [0], [0], [1], [0, 0, 1, 1], [], []>} : vector<2x32xf32>, vector<32x128xf32>, vector<2x128xf32> -> vector<2x128xf32>
    %125 = arith.addf %123, %124 : vector<2x128xf32>
    %126 = arith.addf %125, %10 : vector<2x128xf32>
    %127 = vector.extract_strided_slice %126 {offsets = [0, 0], sizes = [2, 64], strides = [1, 1]} : vector<2x128xf32> to vector<2x64xf32>
    %128 = arith.negf %127 : vector<2x64xf32>
    %129 = math.exp %128 : vector<2x64xf32>
    %cst_38 = arith.constant 1.000000e+00 : f32
    %130 = vector.broadcast %cst_38 : f32 to vector<2x64xf32>
    %131 = arith.addf %130, %129 : vector<2x64xf32>
    %132 = arith.divf %130, %131 : vector<2x64xf32>
    %133 = vector.extract_strided_slice %132 {offsets = [0, 0], sizes = [2, 32], strides = [1, 1]} : vector<2x64xf32> to vector<2x32xf32>
    %134 = vector.extract_strided_slice %132 {offsets = [0, 32], sizes = [2, 32], strides = [1, 1]} : vector<2x64xf32> to vector<2x32xf32>
    %135 = vector.extract_strided_slice %126 {offsets = [0, 96], sizes = [2, 32], strides = [1, 1]} : vector<2x128xf32> to vector<2x32xf32>
    %136 = vector.extract_strided_slice %126 {offsets = [0, 64], sizes = [2, 32], strides = [1, 1]} : vector<2x128xf32> to vector<2x32xf32>
    %cst_39 = arith.constant 1.000000e+00 : f32
    %137 = vector.broadcast %cst_39 : f32 to vector<2x32xf32>
    %138 = arith.subf %133, %137 : vector<2x32xf32>
    %139 = arith.mulf %138, %135 : vector<2x32xf32>
    %140 = arith.addf %136, %139 : vector<2x32xf32>
    %141 = math.tanh %140 : vector<2x32xf32>
    %cst_40 = arith.constant 1.000000e+00 : f32
    %142 = vector.broadcast %cst_40 : f32 to vector<2x32xf32>
    %143 = arith.subf %142, %134 : vector<2x32xf32>
    %144 = arith.mulf %143, %141 : vector<2x32xf32>
    %145 = arith.mulf %134, %94 : vector<2x32xf32>
    %146 = arith.addf %144, %145 : vector<2x32xf32>
    %cst_41 = arith.constant 0.000000e+00 : f32
    %147 = vector.broadcast %cst_41 : f32 to vector<2x32xf32>
    %148 = arith.maximumf %146, %147 : vector<2x32xf32>
    %cst_42 = arith.constant dense<0.000000e+00> : vector<2x128xf32>
    %149 = tpu.matmul %148, %2, %cst_42 {dimension_numbers = #tpu.dot_dimension_numbers<[1], [0], [0], [1], [0, 0, 1, 1], [], []>} : vector<2x32xf32>, vector<32x128xf32>, vector<2x128xf32> -> vector<2x128xf32>
    %cst_43 = arith.constant dense<0.000000e+00> : vector<2x128xf32>
    %150 = tpu.matmul %120, %3, %cst_43 {dimension_numbers = #tpu.dot_dimension_numbers<[1], [0], [0], [1], [0, 0, 1, 1], [], []>} : vector<2x32xf32>, vector<32x128xf32>, vector<2x128xf32> -> vector<2x128xf32>
    %151 = arith.addf %149, %150 : vector<2x128xf32>
    %152 = arith.addf %151, %13 : vector<2x128xf32>
    %153 = vector.extract_strided_slice %152 {offsets = [0, 0], sizes = [2, 64], strides = [1, 1]} : vector<2x128xf32> to vector<2x64xf32>
    %154 = arith.negf %153 : vector<2x64xf32>
    %155 = math.exp %154 : vector<2x64xf32>
    %cst_44 = arith.constant 1.000000e+00 : f32
    %156 = vector.broadcast %cst_44 : f32 to vector<2x64xf32>
    %157 = arith.addf %156, %155 : vector<2x64xf32>
    %158 = arith.divf %156, %157 : vector<2x64xf32>
    %159 = vector.extract_strided_slice %158 {offsets = [0, 0], sizes = [2, 32], strides = [1, 1]} : vector<2x64xf32> to vector<2x32xf32>
    %160 = vector.extract_strided_slice %158 {offsets = [0, 32], sizes = [2, 32], strides = [1, 1]} : vector<2x64xf32> to vector<2x32xf32>
    %161 = vector.extract_strided_slice %152 {offsets = [0, 96], sizes = [2, 32], strides = [1, 1]} : vector<2x128xf32> to vector<2x32xf32>
    %162 = vector.extract_strided_slice %152 {offsets = [0, 64], sizes = [2, 32], strides = [1, 1]} : vector<2x128xf32> to vector<2x32xf32>
    %cst_45 = arith.constant 1.000000e+00 : f32
    %163 = vector.broadcast %cst_45 : f32 to vector<2x32xf32>
    %164 = arith.subf %159, %163 : vector<2x32xf32>
    %165 = arith.mulf %164, %161 : vector<2x32xf32>
    %166 = arith.addf %162, %165 : vector<2x32xf32>
    %167 = math.tanh %166 : vector<2x32xf32>
    %cst_46 = arith.constant 1.000000e+00 : f32
    %168 = vector.broadcast %cst_46 : f32 to vector<2x32xf32>
    %169 = arith.subf %168, %160 : vector<2x32xf32>
    %170 = arith.mulf %169, %167 : vector<2x32xf32>
    %171 = arith.mulf %160, %120 : vector<2x32xf32>
    %172 = arith.addf %170, %171 : vector<2x32xf32>
    %173 = vector.extract_strided_slice %14 {offsets = [0, 3, 0], sizes = [2, 1, 16], strides = [1, 1, 1]} : vector<2x8x16xf32> to vector<2x1x16xf32>
    %174 = vector.shape_cast %173 : vector<2x1x16xf32> to vector<2x16xf32>
    %cst_47 = arith.constant dense<0.000000e+00> : vector<2x128xf32>
    %175 = tpu.matmul %174, %0, %cst_47 {dimension_numbers = #tpu.dot_dimension_numbers<[1], [0], [0], [1], [0, 0, 1, 1], [], []>} : vector<2x16xf32>, vector<16x128xf32>, vector<2x128xf32> -> vector<2x128xf32>
    %cst_48 = arith.constant dense<0.000000e+00> : vector<2x128xf32>
    %176 = tpu.matmul %146, %1, %cst_48 {dimension_numbers = #tpu.dot_dimension_numbers<[1], [0], [0], [1], [0, 0, 1, 1], [], []>} : vector<2x32xf32>, vector<32x128xf32>, vector<2x128xf32> -> vector<2x128xf32>
    %177 = arith.addf %175, %176 : vector<2x128xf32>
    %178 = arith.addf %177, %10 : vector<2x128xf32>
    %179 = vector.extract_strided_slice %178 {offsets = [0, 0], sizes = [2, 64], strides = [1, 1]} : vector<2x128xf32> to vector<2x64xf32>
    %180 = arith.negf %179 : vector<2x64xf32>
    %181 = math.exp %180 : vector<2x64xf32>
    %cst_49 = arith.constant 1.000000e+00 : f32
    %182 = vector.broadcast %cst_49 : f32 to vector<2x64xf32>
    %183 = arith.addf %182, %181 : vector<2x64xf32>
    %184 = arith.divf %182, %183 : vector<2x64xf32>
    %185 = vector.extract_strided_slice %184 {offsets = [0, 0], sizes = [2, 32], strides = [1, 1]} : vector<2x64xf32> to vector<2x32xf32>
    %186 = vector.extract_strided_slice %184 {offsets = [0, 32], sizes = [2, 32], strides = [1, 1]} : vector<2x64xf32> to vector<2x32xf32>
    %187 = vector.extract_strided_slice %178 {offsets = [0, 96], sizes = [2, 32], strides = [1, 1]} : vector<2x128xf32> to vector<2x32xf32>
    %188 = vector.extract_strided_slice %178 {offsets = [0, 64], sizes = [2, 32], strides = [1, 1]} : vector<2x128xf32> to vector<2x32xf32>
    %cst_50 = arith.constant 1.000000e+00 : f32
    %189 = vector.broadcast %cst_50 : f32 to vector<2x32xf32>
    %190 = arith.subf %185, %189 : vector<2x32xf32>
    %191 = arith.mulf %190, %187 : vector<2x32xf32>
    %192 = arith.addf %188, %191 : vector<2x32xf32>
    %193 = math.tanh %192 : vector<2x32xf32>
    %cst_51 = arith.constant 1.000000e+00 : f32
    %194 = vector.broadcast %cst_51 : f32 to vector<2x32xf32>
    %195 = arith.subf %194, %186 : vector<2x32xf32>
    %196 = arith.mulf %195, %193 : vector<2x32xf32>
    %197 = arith.mulf %186, %146 : vector<2x32xf32>
    %198 = arith.addf %196, %197 : vector<2x32xf32>
    %cst_52 = arith.constant 0.000000e+00 : f32
    %199 = vector.broadcast %cst_52 : f32 to vector<2x32xf32>
    %200 = arith.maximumf %198, %199 : vector<2x32xf32>
    %cst_53 = arith.constant dense<0.000000e+00> : vector<2x128xf32>
    %201 = tpu.matmul %200, %2, %cst_53 {dimension_numbers = #tpu.dot_dimension_numbers<[1], [0], [0], [1], [0, 0, 1, 1], [], []>} : vector<2x32xf32>, vector<32x128xf32>, vector<2x128xf32> -> vector<2x128xf32>
    %cst_54 = arith.constant dense<0.000000e+00> : vector<2x128xf32>
    %202 = tpu.matmul %172, %3, %cst_54 {dimension_numbers = #tpu.dot_dimension_numbers<[1], [0], [0], [1], [0, 0, 1, 1], [], []>} : vector<2x32xf32>, vector<32x128xf32>, vector<2x128xf32> -> vector<2x128xf32>
    %203 = arith.addf %201, %202 : vector<2x128xf32>
    %204 = arith.addf %203, %13 : vector<2x128xf32>
    %205 = vector.extract_strided_slice %204 {offsets = [0, 0], sizes = [2, 64], strides = [1, 1]} : vector<2x128xf32> to vector<2x64xf32>
    %206 = arith.negf %205 : vector<2x64xf32>
    %207 = math.exp %206 : vector<2x64xf32>
    %cst_55 = arith.constant 1.000000e+00 : f32
    %208 = vector.broadcast %cst_55 : f32 to vector<2x64xf32>
    %209 = arith.addf %208, %207 : vector<2x64xf32>
    %210 = arith.divf %208, %209 : vector<2x64xf32>
    %211 = vector.extract_strided_slice %210 {offsets = [0, 0], sizes = [2, 32], strides = [1, 1]} : vector<2x64xf32> to vector<2x32xf32>
    %212 = vector.extract_strided_slice %210 {offsets = [0, 32], sizes = [2, 32], strides = [1, 1]} : vector<2x64xf32> to vector<2x32xf32>
    %213 = vector.extract_strided_slice %204 {offsets = [0, 96], sizes = [2, 32], strides = [1, 1]} : vector<2x128xf32> to vector<2x32xf32>
    %214 = vector.extract_strided_slice %204 {offsets = [0, 64], sizes = [2, 32], strides = [1, 1]} : vector<2x128xf32> to vector<2x32xf32>
    %cst_56 = arith.constant 1.000000e+00 : f32
    %215 = vector.broadcast %cst_56 : f32 to vector<2x32xf32>
    %216 = arith.subf %211, %215 : vector<2x32xf32>
    %217 = arith.mulf %216, %213 : vector<2x32xf32>
    %218 = arith.addf %214, %217 : vector<2x32xf32>
    %219 = math.tanh %218 : vector<2x32xf32>
    %cst_57 = arith.constant 1.000000e+00 : f32
    %220 = vector.broadcast %cst_57 : f32 to vector<2x32xf32>
    %221 = arith.subf %220, %212 : vector<2x32xf32>
    %222 = arith.mulf %221, %219 : vector<2x32xf32>
    %223 = arith.mulf %212, %172 : vector<2x32xf32>
    %224 = arith.addf %222, %223 : vector<2x32xf32>
    %225 = vector.extract_strided_slice %14 {offsets = [0, 4, 0], sizes = [2, 1, 16], strides = [1, 1, 1]} : vector<2x8x16xf32> to vector<2x1x16xf32>
    %226 = vector.shape_cast %225 : vector<2x1x16xf32> to vector<2x16xf32>
    %cst_58 = arith.constant dense<0.000000e+00> : vector<2x128xf32>
    %227 = tpu.matmul %226, %0, %cst_58 {dimension_numbers = #tpu.dot_dimension_numbers<[1], [0], [0], [1], [0, 0, 1, 1], [], []>} : vector<2x16xf32>, vector<16x128xf32>, vector<2x128xf32> -> vector<2x128xf32>
    %cst_59 = arith.constant dense<0.000000e+00> : vector<2x128xf32>
    %228 = tpu.matmul %198, %1, %cst_59 {dimension_numbers = #tpu.dot_dimension_numbers<[1], [0], [0], [1], [0, 0, 1, 1], [], []>} : vector<2x32xf32>, vector<32x128xf32>, vector<2x128xf32> -> vector<2x128xf32>
    %229 = arith.addf %227, %228 : vector<2x128xf32>
    %230 = arith.addf %229, %10 : vector<2x128xf32>
    %231 = vector.extract_strided_slice %230 {offsets = [0, 0], sizes = [2, 64], strides = [1, 1]} : vector<2x128xf32> to vector<2x64xf32>
    %232 = arith.negf %231 : vector<2x64xf32>
    %233 = math.exp %232 : vector<2x64xf32>
    %cst_60 = arith.constant 1.000000e+00 : f32
    %234 = vector.broadcast %cst_60 : f32 to vector<2x64xf32>
    %235 = arith.addf %234, %233 : vector<2x64xf32>
    %236 = arith.divf %234, %235 : vector<2x64xf32>
    %237 = vector.extract_strided_slice %236 {offsets = [0, 0], sizes = [2, 32], strides = [1, 1]} : vector<2x64xf32> to vector<2x32xf32>
    %238 = vector.extract_strided_slice %236 {offsets = [0, 32], sizes = [2, 32], strides = [1, 1]} : vector<2x64xf32> to vector<2x32xf32>
    %239 = vector.extract_strided_slice %230 {offsets = [0, 96], sizes = [2, 32], strides = [1, 1]} : vector<2x128xf32> to vector<2x32xf32>
    %240 = vector.extract_strided_slice %230 {offsets = [0, 64], sizes = [2, 32], strides = [1, 1]} : vector<2x128xf32> to vector<2x32xf32>
    %cst_61 = arith.constant 1.000000e+00 : f32
    %241 = vector.broadcast %cst_61 : f32 to vector<2x32xf32>
    %242 = arith.subf %237, %241 : vector<2x32xf32>
    %243 = arith.mulf %242, %239 : vector<2x32xf32>
    %244 = arith.addf %240, %243 : vector<2x32xf32>
    %245 = math.tanh %244 : vector<2x32xf32>
    %cst_62 = arith.constant 1.000000e+00 : f32
    %246 = vector.broadcast %cst_62 : f32 to vector<2x32xf32>
    %247 = arith.subf %246, %238 : vector<2x32xf32>
    %248 = arith.mulf %247, %245 : vector<2x32xf32>
    %249 = arith.mulf %238, %198 : vector<2x32xf32>
    %250 = arith.addf %248, %249 : vector<2x32xf32>
    %cst_63 = arith.constant 0.000000e+00 : f32
    %251 = vector.broadcast %cst_63 : f32 to vector<2x32xf32>
    %252 = arith.maximumf %250, %251 : vector<2x32xf32>
    %cst_64 = arith.constant dense<0.000000e+00> : vector<2x128xf32>
    %253 = tpu.matmul %252, %2, %cst_64 {dimension_numbers = #tpu.dot_dimension_numbers<[1], [0], [0], [1], [0, 0, 1, 1], [], []>} : vector<2x32xf32>, vector<32x128xf32>, vector<2x128xf32> -> vector<2x128xf32>
    %cst_65 = arith.constant dense<0.000000e+00> : vector<2x128xf32>
    %254 = tpu.matmul %224, %3, %cst_65 {dimension_numbers = #tpu.dot_dimension_numbers<[1], [0], [0], [1], [0, 0, 1, 1], [], []>} : vector<2x32xf32>, vector<32x128xf32>, vector<2x128xf32> -> vector<2x128xf32>
    %255 = arith.addf %253, %254 : vector<2x128xf32>
    %256 = arith.addf %255, %13 : vector<2x128xf32>
    %257 = vector.extract_strided_slice %256 {offsets = [0, 0], sizes = [2, 64], strides = [1, 1]} : vector<2x128xf32> to vector<2x64xf32>
    %258 = arith.negf %257 : vector<2x64xf32>
    %259 = math.exp %258 : vector<2x64xf32>
    %cst_66 = arith.constant 1.000000e+00 : f32
    %260 = vector.broadcast %cst_66 : f32 to vector<2x64xf32>
    %261 = arith.addf %260, %259 : vector<2x64xf32>
    %262 = arith.divf %260, %261 : vector<2x64xf32>
    %263 = vector.extract_strided_slice %262 {offsets = [0, 0], sizes = [2, 32], strides = [1, 1]} : vector<2x64xf32> to vector<2x32xf32>
    %264 = vector.extract_strided_slice %262 {offsets = [0, 32], sizes = [2, 32], strides = [1, 1]} : vector<2x64xf32> to vector<2x32xf32>
    %265 = vector.extract_strided_slice %256 {offsets = [0, 96], sizes = [2, 32], strides = [1, 1]} : vector<2x128xf32> to vector<2x32xf32>
    %266 = vector.extract_strided_slice %256 {offsets = [0, 64], sizes = [2, 32], strides = [1, 1]} : vector<2x128xf32> to vector<2x32xf32>
    %cst_67 = arith.constant 1.000000e+00 : f32
    %267 = vector.broadcast %cst_67 : f32 to vector<2x32xf32>
    %268 = arith.subf %263, %267 : vector<2x32xf32>
    %269 = arith.mulf %268, %265 : vector<2x32xf32>
    %270 = arith.addf %266, %269 : vector<2x32xf32>
    %271 = math.tanh %270 : vector<2x32xf32>
    %cst_68 = arith.constant 1.000000e+00 : f32
    %272 = vector.broadcast %cst_68 : f32 to vector<2x32xf32>
    %273 = arith.subf %272, %264 : vector<2x32xf32>
    %274 = arith.mulf %273, %271 : vector<2x32xf32>
    %275 = arith.mulf %264, %224 : vector<2x32xf32>
    %276 = arith.addf %274, %275 : vector<2x32xf32>
    %277 = vector.extract_strided_slice %14 {offsets = [0, 5, 0], sizes = [2, 1, 16], strides = [1, 1, 1]} : vector<2x8x16xf32> to vector<2x1x16xf32>
    %278 = vector.shape_cast %277 : vector<2x1x16xf32> to vector<2x16xf32>
    %cst_69 = arith.constant dense<0.000000e+00> : vector<2x128xf32>
    %279 = tpu.matmul %278, %0, %cst_69 {dimension_numbers = #tpu.dot_dimension_numbers<[1], [0], [0], [1], [0, 0, 1, 1], [], []>} : vector<2x16xf32>, vector<16x128xf32>, vector<2x128xf32> -> vector<2x128xf32>
    %cst_70 = arith.constant dense<0.000000e+00> : vector<2x128xf32>
    %280 = tpu.matmul %250, %1, %cst_70 {dimension_numbers = #tpu.dot_dimension_numbers<[1], [0], [0], [1], [0, 0, 1, 1], [], []>} : vector<2x32xf32>, vector<32x128xf32>, vector<2x128xf32> -> vector<2x128xf32>
    %281 = arith.addf %279, %280 : vector<2x128xf32>
    %282 = arith.addf %281, %10 : vector<2x128xf32>
    %283 = vector.extract_strided_slice %282 {offsets = [0, 0], sizes = [2, 64], strides = [1, 1]} : vector<2x128xf32> to vector<2x64xf32>
    %284 = arith.negf %283 : vector<2x64xf32>
    %285 = math.exp %284 : vector<2x64xf32>
    %cst_71 = arith.constant 1.000000e+00 : f32
    %286 = vector.broadcast %cst_71 : f32 to vector<2x64xf32>
    %287 = arith.addf %286, %285 : vector<2x64xf32>
    %288 = arith.divf %286, %287 : vector<2x64xf32>
    %289 = vector.extract_strided_slice %288 {offsets = [0, 0], sizes = [2, 32], strides = [1, 1]} : vector<2x64xf32> to vector<2x32xf32>
    %290 = vector.extract_strided_slice %288 {offsets = [0, 32], sizes = [2, 32], strides = [1, 1]} : vector<2x64xf32> to vector<2x32xf32>
    %291 = vector.extract_strided_slice %282 {offsets = [0, 96], sizes = [2, 32], strides = [1, 1]} : vector<2x128xf32> to vector<2x32xf32>
    %292 = vector.extract_strided_slice %282 {offsets = [0, 64], sizes = [2, 32], strides = [1, 1]} : vector<2x128xf32> to vector<2x32xf32>
    %cst_72 = arith.constant 1.000000e+00 : f32
    %293 = vector.broadcast %cst_72 : f32 to vector<2x32xf32>
    %294 = arith.subf %289, %293 : vector<2x32xf32>
    %295 = arith.mulf %294, %291 : vector<2x32xf32>
    %296 = arith.addf %292, %295 : vector<2x32xf32>
    %297 = math.tanh %296 : vector<2x32xf32>
    %cst_73 = arith.constant 1.000000e+00 : f32
    %298 = vector.broadcast %cst_73 : f32 to vector<2x32xf32>
    %299 = arith.subf %298, %290 : vector<2x32xf32>
    %300 = arith.mulf %299, %297 : vector<2x32xf32>
    %301 = arith.mulf %290, %250 : vector<2x32xf32>
    %302 = arith.addf %300, %301 : vector<2x32xf32>
    %cst_74 = arith.constant 0.000000e+00 : f32
    %303 = vector.broadcast %cst_74 : f32 to vector<2x32xf32>
    %304 = arith.maximumf %302, %303 : vector<2x32xf32>
    %cst_75 = arith.constant dense<0.000000e+00> : vector<2x128xf32>
    %305 = tpu.matmul %304, %2, %cst_75 {dimension_numbers = #tpu.dot_dimension_numbers<[1], [0], [0], [1], [0, 0, 1, 1], [], []>} : vector<2x32xf32>, vector<32x128xf32>, vector<2x128xf32> -> vector<2x128xf32>
    %cst_76 = arith.constant dense<0.000000e+00> : vector<2x128xf32>
    %306 = tpu.matmul %276, %3, %cst_76 {dimension_numbers = #tpu.dot_dimension_numbers<[1], [0], [0], [1], [0, 0, 1, 1], [], []>} : vector<2x32xf32>, vector<32x128xf32>, vector<2x128xf32> -> vector<2x128xf32>
    %307 = arith.addf %305, %306 : vector<2x128xf32>
    %308 = arith.addf %307, %13 : vector<2x128xf32>
    %309 = vector.extract_strided_slice %308 {offsets = [0, 0], sizes = [2, 64], strides = [1, 1]} : vector<2x128xf32> to vector<2x64xf32>
    %310 = arith.negf %309 : vector<2x64xf32>
    %311 = math.exp %310 : vector<2x64xf32>
    %cst_77 = arith.constant 1.000000e+00 : f32
    %312 = vector.broadcast %cst_77 : f32 to vector<2x64xf32>
    %313 = arith.addf %312, %311 : vector<2x64xf32>
    %314 = arith.divf %312, %313 : vector<2x64xf32>
    %315 = vector.extract_strided_slice %314 {offsets = [0, 0], sizes = [2, 32], strides = [1, 1]} : vector<2x64xf32> to vector<2x32xf32>
    %316 = vector.extract_strided_slice %314 {offsets = [0, 32], sizes = [2, 32], strides = [1, 1]} : vector<2x64xf32> to vector<2x32xf32>
    %317 = vector.extract_strided_slice %308 {offsets = [0, 96], sizes = [2, 32], strides = [1, 1]} : vector<2x128xf32> to vector<2x32xf32>
    %318 = vector.extract_strided_slice %308 {offsets = [0, 64], sizes = [2, 32], strides = [1, 1]} : vector<2x128xf32> to vector<2x32xf32>
    %cst_78 = arith.constant 1.000000e+00 : f32
    %319 = vector.broadcast %cst_78 : f32 to vector<2x32xf32>
    %320 = arith.subf %315, %319 : vector<2x32xf32>
    %321 = arith.mulf %320, %317 : vector<2x32xf32>
    %322 = arith.addf %318, %321 : vector<2x32xf32>
    %323 = math.tanh %322 : vector<2x32xf32>
    %cst_79 = arith.constant 1.000000e+00 : f32
    %324 = vector.broadcast %cst_79 : f32 to vector<2x32xf32>
    %325 = arith.subf %324, %316 : vector<2x32xf32>
    %326 = arith.mulf %325, %323 : vector<2x32xf32>
    %327 = arith.mulf %316, %276 : vector<2x32xf32>
    %328 = arith.addf %326, %327 : vector<2x32xf32>
    %329 = vector.extract_strided_slice %14 {offsets = [0, 6, 0], sizes = [2, 1, 16], strides = [1, 1, 1]} : vector<2x8x16xf32> to vector<2x1x16xf32>
    %330 = vector.shape_cast %329 : vector<2x1x16xf32> to vector<2x16xf32>
    %cst_80 = arith.constant dense<0.000000e+00> : vector<2x128xf32>
    %331 = tpu.matmul %330, %0, %cst_80 {dimension_numbers = #tpu.dot_dimension_numbers<[1], [0], [0], [1], [0, 0, 1, 1], [], []>} : vector<2x16xf32>, vector<16x128xf32>, vector<2x128xf32> -> vector<2x128xf32>
    %cst_81 = arith.constant dense<0.000000e+00> : vector<2x128xf32>
    %332 = tpu.matmul %302, %1, %cst_81 {dimension_numbers = #tpu.dot_dimension_numbers<[1], [0], [0], [1], [0, 0, 1, 1], [], []>} : vector<2x32xf32>, vector<32x128xf32>, vector<2x128xf32> -> vector<2x128xf32>
    %333 = arith.addf %331, %332 : vector<2x128xf32>
    %334 = arith.addf %333, %10 : vector<2x128xf32>
    %335 = vector.extract_strided_slice %334 {offsets = [0, 0], sizes = [2, 64], strides = [1, 1]} : vector<2x128xf32> to vector<2x64xf32>
    %336 = arith.negf %335 : vector<2x64xf32>
    %337 = math.exp %336 : vector<2x64xf32>
    %cst_82 = arith.constant 1.000000e+00 : f32
    %338 = vector.broadcast %cst_82 : f32 to vector<2x64xf32>
    %339 = arith.addf %338, %337 : vector<2x64xf32>
    %340 = arith.divf %338, %339 : vector<2x64xf32>
    %341 = vector.extract_strided_slice %340 {offsets = [0, 0], sizes = [2, 32], strides = [1, 1]} : vector<2x64xf32> to vector<2x32xf32>
    %342 = vector.extract_strided_slice %340 {offsets = [0, 32], sizes = [2, 32], strides = [1, 1]} : vector<2x64xf32> to vector<2x32xf32>
    %343 = vector.extract_strided_slice %334 {offsets = [0, 96], sizes = [2, 32], strides = [1, 1]} : vector<2x128xf32> to vector<2x32xf32>
    %344 = vector.extract_strided_slice %334 {offsets = [0, 64], sizes = [2, 32], strides = [1, 1]} : vector<2x128xf32> to vector<2x32xf32>
    %cst_83 = arith.constant 1.000000e+00 : f32
    %345 = vector.broadcast %cst_83 : f32 to vector<2x32xf32>
    %346 = arith.subf %341, %345 : vector<2x32xf32>
    %347 = arith.mulf %346, %343 : vector<2x32xf32>
    %348 = arith.addf %344, %347 : vector<2x32xf32>
    %349 = math.tanh %348 : vector<2x32xf32>
    %cst_84 = arith.constant 1.000000e+00 : f32
    %350 = vector.broadcast %cst_84 : f32 to vector<2x32xf32>
    %351 = arith.subf %350, %342 : vector<2x32xf32>
    %352 = arith.mulf %351, %349 : vector<2x32xf32>
    %353 = arith.mulf %342, %302 : vector<2x32xf32>
    %354 = arith.addf %352, %353 : vector<2x32xf32>
    %cst_85 = arith.constant 0.000000e+00 : f32
    %355 = vector.broadcast %cst_85 : f32 to vector<2x32xf32>
    %356 = arith.maximumf %354, %355 : vector<2x32xf32>
    %cst_86 = arith.constant dense<0.000000e+00> : vector<2x128xf32>
    %357 = tpu.matmul %356, %2, %cst_86 {dimension_numbers = #tpu.dot_dimension_numbers<[1], [0], [0], [1], [0, 0, 1, 1], [], []>} : vector<2x32xf32>, vector<32x128xf32>, vector<2x128xf32> -> vector<2x128xf32>
    %cst_87 = arith.constant dense<0.000000e+00> : vector<2x128xf32>
    %358 = tpu.matmul %328, %3, %cst_87 {dimension_numbers = #tpu.dot_dimension_numbers<[1], [0], [0], [1], [0, 0, 1, 1], [], []>} : vector<2x32xf32>, vector<32x128xf32>, vector<2x128xf32> -> vector<2x128xf32>
    %359 = arith.addf %357, %358 : vector<2x128xf32>
    %360 = arith.addf %359, %13 : vector<2x128xf32>
    %361 = vector.extract_strided_slice %360 {offsets = [0, 0], sizes = [2, 64], strides = [1, 1]} : vector<2x128xf32> to vector<2x64xf32>
    %362 = arith.negf %361 : vector<2x64xf32>
    %363 = math.exp %362 : vector<2x64xf32>
    %cst_88 = arith.constant 1.000000e+00 : f32
    %364 = vector.broadcast %cst_88 : f32 to vector<2x64xf32>
    %365 = arith.addf %364, %363 : vector<2x64xf32>
    %366 = arith.divf %364, %365 : vector<2x64xf32>
    %367 = vector.extract_strided_slice %366 {offsets = [0, 0], sizes = [2, 32], strides = [1, 1]} : vector<2x64xf32> to vector<2x32xf32>
    %368 = vector.extract_strided_slice %366 {offsets = [0, 32], sizes = [2, 32], strides = [1, 1]} : vector<2x64xf32> to vector<2x32xf32>
    %369 = vector.extract_strided_slice %360 {offsets = [0, 96], sizes = [2, 32], strides = [1, 1]} : vector<2x128xf32> to vector<2x32xf32>
    %370 = vector.extract_strided_slice %360 {offsets = [0, 64], sizes = [2, 32], strides = [1, 1]} : vector<2x128xf32> to vector<2x32xf32>
    %cst_89 = arith.constant 1.000000e+00 : f32
    %371 = vector.broadcast %cst_89 : f32 to vector<2x32xf32>
    %372 = arith.subf %367, %371 : vector<2x32xf32>
    %373 = arith.mulf %372, %369 : vector<2x32xf32>
    %374 = arith.addf %370, %373 : vector<2x32xf32>
    %375 = math.tanh %374 : vector<2x32xf32>
    %cst_90 = arith.constant 1.000000e+00 : f32
    %376 = vector.broadcast %cst_90 : f32 to vector<2x32xf32>
    %377 = arith.subf %376, %368 : vector<2x32xf32>
    %378 = arith.mulf %377, %375 : vector<2x32xf32>
    %379 = arith.mulf %368, %328 : vector<2x32xf32>
    %380 = arith.addf %378, %379 : vector<2x32xf32>
    %381 = vector.extract_strided_slice %14 {offsets = [0, 7, 0], sizes = [2, 1, 16], strides = [1, 1, 1]} : vector<2x8x16xf32> to vector<2x1x16xf32>
    %382 = vector.shape_cast %381 : vector<2x1x16xf32> to vector<2x16xf32>
    %cst_91 = arith.constant dense<0.000000e+00> : vector<2x128xf32>
    %383 = tpu.matmul %382, %0, %cst_91 {dimension_numbers = #tpu.dot_dimension_numbers<[1], [0], [0], [1], [0, 0, 1, 1], [], []>} : vector<2x16xf32>, vector<16x128xf32>, vector<2x128xf32> -> vector<2x128xf32>
    %cst_92 = arith.constant dense<0.000000e+00> : vector<2x128xf32>
    %384 = tpu.matmul %354, %1, %cst_92 {dimension_numbers = #tpu.dot_dimension_numbers<[1], [0], [0], [1], [0, 0, 1, 1], [], []>} : vector<2x32xf32>, vector<32x128xf32>, vector<2x128xf32> -> vector<2x128xf32>
    %385 = arith.addf %383, %384 : vector<2x128xf32>
    %386 = arith.addf %385, %10 : vector<2x128xf32>
    %387 = vector.extract_strided_slice %386 {offsets = [0, 0], sizes = [2, 64], strides = [1, 1]} : vector<2x128xf32> to vector<2x64xf32>
    %388 = arith.negf %387 : vector<2x64xf32>
    %389 = math.exp %388 : vector<2x64xf32>
    %cst_93 = arith.constant 1.000000e+00 : f32
    %390 = vector.broadcast %cst_93 : f32 to vector<2x64xf32>
    %391 = arith.addf %390, %389 : vector<2x64xf32>
    %392 = arith.divf %390, %391 : vector<2x64xf32>
    %393 = vector.extract_strided_slice %392 {offsets = [0, 0], sizes = [2, 32], strides = [1, 1]} : vector<2x64xf32> to vector<2x32xf32>
    %394 = vector.extract_strided_slice %392 {offsets = [0, 32], sizes = [2, 32], strides = [1, 1]} : vector<2x64xf32> to vector<2x32xf32>
    %395 = vector.extract_strided_slice %386 {offsets = [0, 96], sizes = [2, 32], strides = [1, 1]} : vector<2x128xf32> to vector<2x32xf32>
    %396 = vector.extract_strided_slice %386 {offsets = [0, 64], sizes = [2, 32], strides = [1, 1]} : vector<2x128xf32> to vector<2x32xf32>
    %cst_94 = arith.constant 1.000000e+00 : f32
    %397 = vector.broadcast %cst_94 : f32 to vector<2x32xf32>
    %398 = arith.subf %393, %397 : vector<2x32xf32>
    %399 = arith.mulf %398, %395 : vector<2x32xf32>
    %400 = arith.addf %396, %399 : vector<2x32xf32>
    %401 = math.tanh %400 : vector<2x32xf32>
    %cst_95 = arith.constant 1.000000e+00 : f32
    %402 = vector.broadcast %cst_95 : f32 to vector<2x32xf32>
    %403 = arith.subf %402, %394 : vector<2x32xf32>
    %404 = arith.mulf %403, %401 : vector<2x32xf32>
    %405 = arith.mulf %394, %354 : vector<2x32xf32>
    %406 = arith.addf %404, %405 : vector<2x32xf32>
    %cst_96 = arith.constant 0.000000e+00 : f32
    %407 = vector.broadcast %cst_96 : f32 to vector<2x32xf32>
    %408 = arith.maximumf %406, %407 : vector<2x32xf32>
    %cst_97 = arith.constant dense<0.000000e+00> : vector<2x128xf32>
    %409 = tpu.matmul %408, %2, %cst_97 {dimension_numbers = #tpu.dot_dimension_numbers<[1], [0], [0], [1], [0, 0, 1, 1], [], []>} : vector<2x32xf32>, vector<32x128xf32>, vector<2x128xf32> -> vector<2x128xf32>
    %cst_98 = arith.constant dense<0.000000e+00> : vector<2x128xf32>
    %410 = tpu.matmul %380, %3, %cst_98 {dimension_numbers = #tpu.dot_dimension_numbers<[1], [0], [0], [1], [0, 0, 1, 1], [], []>} : vector<2x32xf32>, vector<32x128xf32>, vector<2x128xf32> -> vector<2x128xf32>
    %411 = arith.addf %409, %410 : vector<2x128xf32>
    %412 = arith.addf %411, %13 : vector<2x128xf32>
    %413 = vector.extract_strided_slice %412 {offsets = [0, 0], sizes = [2, 64], strides = [1, 1]} : vector<2x128xf32> to vector<2x64xf32>
    %414 = arith.negf %413 : vector<2x64xf32>
    %415 = math.exp %414 : vector<2x64xf32>
    %cst_99 = arith.constant 1.000000e+00 : f32
    %416 = vector.broadcast %cst_99 : f32 to vector<2x64xf32>
    %417 = arith.addf %416, %415 : vector<2x64xf32>
    %418 = arith.divf %416, %417 : vector<2x64xf32>
    %419 = vector.extract_strided_slice %418 {offsets = [0, 0], sizes = [2, 32], strides = [1, 1]} : vector<2x64xf32> to vector<2x32xf32>
    %420 = vector.extract_strided_slice %418 {offsets = [0, 32], sizes = [2, 32], strides = [1, 1]} : vector<2x64xf32> to vector<2x32xf32>
    %421 = vector.extract_strided_slice %412 {offsets = [0, 96], sizes = [2, 32], strides = [1, 1]} : vector<2x128xf32> to vector<2x32xf32>
    %422 = vector.extract_strided_slice %412 {offsets = [0, 64], sizes = [2, 32], strides = [1, 1]} : vector<2x128xf32> to vector<2x32xf32>
    %cst_100 = arith.constant 1.000000e+00 : f32
    %423 = vector.broadcast %cst_100 : f32 to vector<2x32xf32>
    %424 = arith.subf %419, %423 : vector<2x32xf32>
    %425 = arith.mulf %424, %421 : vector<2x32xf32>
    %426 = arith.addf %422, %425 : vector<2x32xf32>
    %427 = math.tanh %426 : vector<2x32xf32>
    %cst_101 = arith.constant 1.000000e+00 : f32
    %428 = vector.broadcast %cst_101 : f32 to vector<2x32xf32>
    %429 = arith.subf %428, %420 : vector<2x32xf32>
    %430 = arith.mulf %429, %427 : vector<2x32xf32>
    %431 = arith.mulf %420, %380 : vector<2x32xf32>
    %432 = arith.addf %430, %431 : vector<2x32xf32>
    %cst_102 = arith.constant 0.000000e+00 : f32
    %433 = vector.broadcast %cst_102 : f32 to vector<2x32xf32>
    %434 = arith.maximumf %432, %433 : vector<2x32xf32>
    %cst_103 = arith.constant dense<0.000000e+00> : vector<2x128xf32>
    %435 = tpu.matmul %434, %4, %cst_103 {dimension_numbers = #tpu.dot_dimension_numbers<[1], [0], [0], [1], [0, 0, 1, 1], [], []>} : vector<2x32xf32>, vector<32x128xf32>, vector<2x128xf32> -> vector<2x128xf32>
    %436 = vector.broadcast %6 : vector<1x128xf32> to vector<2x128xf32>
    %437 = arith.addf %435, %436 : vector<2x128xf32>
    %cst_104 = arith.constant 0.000000e+00 : f32
    %438 = vector.broadcast %cst_104 : f32 to vector<2x128xf32>
    %439 = arith.maximumf %437, %438 : vector<2x128xf32>
    %440 = vector.extract_strided_slice %439 {offsets = [0, 0], sizes = [2, 16], strides = [1, 1]} : vector<2x128xf32> to vector<2x16xf32>
    %cst_105 = arith.constant dense<0.000000e+00> : vector<2x128xf32>
    %441 = tpu.matmul %440, %5, %cst_105 {dimension_numbers = #tpu.dot_dimension_numbers<[1], [0], [0], [1], [0, 0, 1, 1], [], []>} : vector<2x16xf32>, vector<16x128xf32>, vector<2x128xf32> -> vector<2x128xf32>
    %442 = vector.broadcast %7 : vector<1x128xf32> to vector<2x128xf32>
    %443 = arith.addf %441, %442 : vector<2x128xf32>
    %cst_106 = arith.constant 0.000000e+00 : f32
    %444 = vector.broadcast %cst_106 : f32 to vector<2x128xf32>
    %445 = arith.maximumf %443, %444 : vector<2x128xf32>
    %c0_107 = arith.constant 0 : index
    %c0_108 = arith.constant 0 : index
    %446 = vector.load %arg2[%c0_107, %c0_108] : memref<2x128xf32, #tpu.memory_space<vmem>>, vector<2x128xf32>
    tpu.vector_store %arg2[%c0_107, %c0_108], %445 {strides = array<i32>} : memref<2x128xf32, #tpu.memory_space<vmem>>, vector<2x128xf32>,
    return
  }
}

</mosaic_0001>

<llo_original>
// kernel: tpu_custom_call.1
$region0: #{tpu_custom_call.1}
  #allocation0 [shape = 'u32[]', space=smem, size = 0x4, offset = 0x4, fixed_abs, tag = 'smem constant byte address 0x4 - core index']
  #allocation1 [shape = 'u32[72,128]{1,0:T(1,128)}', space=vmem, size = 0x9000, scoped, tag = 'internal scratch']
  %s0 = inlined_call_operand.hbm [shape: f32[2,8,16], index: 0, kind: input, shape index: {}]
  %s1 = inlined_call_operand.hbm [shape: f32[192,128], index: 1, kind: input, shape index: {}]
  %s2 = inlined_call_operand.hbm [shape: f32[2,128], index: 2, kind: output, shape index: {}]
  %s3 = sld [smem:[#allocation0]]
  $region26: #{tpu_custom_call.1} parent=0
    _
  %s5 = ssub.s32 1, %s3
  %s6 = scalar_select 0, %s5, %s3
  $region1: #{tpu_custom_call.1} parent=0
    #allocation2 [shape = 'u8[8192]{0}', space=vmem, size = 0x2000, scoped, tag = 'input window, operand 0, single buffered']
    #allocation3 [shape = 's32[1]{0}', space=sflag, size = 0x4, scoped, tag = 'scoped memory for tpu_custom_call.1']
    #allocation4 [shape = 's32[1]{0}', space=sflag, size = 0x4, scoped, tag = 'scoped memory for tpu_custom_call.1']
    #allocation5 [shape = 'u8[98304]{0}', space=vmem, size = 0x18000, scoped, tag = 'input window, operand 1, single buffered']
    #allocation6 [shape = 's32[1]{0}', space=sflag, size = 0x4, scoped, tag = 'scoped memory for tpu_custom_call.1']
    #allocation7 [shape = 'u8[1024]{0}', space=vmem, size = 0x400, scoped, tag = 'output window, operand 0, single buffered']
    %7 = vsyncpa [#allocation3], 0
    %8 = vsyncpa [#allocation6], 0
    %9 = vsyncpa [#allocation4], 0
    // Predicated region
    $region2: #{tpu_custom_call.1} parent=1 // pred_check
      _
    $region3: #{tpu_custom_call.1} parent=1 // pred_check_branch
      %11 = sbr.rel (0) target = $region5
    $region4: #{tpu_custom_call.1} parent=1 // pred_region
      %13 = vsyncadd [#allocation3], 0
      %s14 = sshll.u32 %s0, 4
      %s15 = int_to_ptr.hbm [resolvable:$true] %s14
      %s16 = sshll.u32 [#allocation2], 4
      %s17 = int_to_ptr.vmem [resolvable:$true] %s16
      %22 = dma.hbm_to_vmem [thread:$0]  %s15, 256, %s17, [#allocation3], 128, 128, 8
    $region5: #{tpu_custom_call.1} parent=1 // pred_fallthru
      _
    // Predicated region
    $region6: #{tpu_custom_call.1} parent=1 // pred_check
      _
    $region7: #{tpu_custom_call.1} parent=1 // pred_check_branch
      %24 = sbr.rel (0) target = $region9
    $region8: #{tpu_custom_call.1} parent=1 // pred_region
      %26 = vsyncadd [#allocation6], 0
      %s27 = sshll.u32 %s1, 4
      %s28 = int_to_ptr.hbm [resolvable:$true] %s27
      %s29 = sshll.u32 [#allocation5], 4
      %s30 = int_to_ptr.vmem [resolvable:$true] %s29
      %35 = dma.hbm_to_vmem [thread:$0]  %s28, 3072, %s30, [#allocation6], 128, 128, 8
    $region9: #{tpu_custom_call.1} parent=1 // pred_fallthru
      _
    // Predicated region
    $region10: #{tpu_custom_call.1} parent=1 // pred_check
      _
    $region11: #{tpu_custom_call.1} parent=1 // pred_check_branch
      %37 = sbr.rel (0) target = $region13
    $region12: #{tpu_custom_call.1} parent=1 // pred_region
      %39 = dma.done [#allocation3], 256
    $region13: #{tpu_custom_call.1} parent=1 // pred_fallthru
      _
    // Predicated region
    $region14: #{tpu_custom_call.1} parent=1 // pred_check
      _
    $region15: #{tpu_custom_call.1} parent=1 // pred_check_branch
      %41 = sbr.rel (0) target = $region17
    $region16: #{tpu_custom_call.1} parent=1 // pred_region
      %43 = dma.done [#allocation6], 3072
    $region17: #{tpu_custom_call.1} parent=1 // pred_fallthru
      _
    %v44 = vld [vmem:[#allocation5] sm:$0xff]
    %v45 = vld [vmem:[#allocation5 + $0x8] sm:$0xff]
    %v46 = vld [vmem:[#allocation5 + $0x10] sm:$0xff]
    %v47 = vld [vmem:[#allocation5 + $0x18] sm:$0xff]
    %v48 = vld [vmem:[#allocation5 + $0x20] sm:$0xff]
    %v49 = vld [vmem:[#allocation5 + $0x28] sm:$0xff]
    %v50 = vld [vmem:[#allocation5 + $0x38] sm:$0xff]
    %v51 = vld [vmem:[#allocation5 + $0x40] sm:$0xff]
    %v52 = vld [vmem:[#allocation5 + $0x48] sm:$0xff]
    %v53 = vld [vmem:[#allocation5 + $0x50] sm:$0xff]
    %v54 = vld [vmem:[#allocation5 + $0x58] sm:$0xff]
    %v55 = vld [vmem:[#allocation5 + $0x60] sm:$0xff]
    %v56 = vld [vmem:[#allocation5 + $0x68] sm:$0xff]
    %v57 = vld [vmem:[#allocation5 + $0x70] sm:$0xff]
    %v58 = vld [vmem:[#allocation5 + $0x80] sm:$0xff]
    %v59 = vld [vmem:[#allocation5 + $0x88] sm:$0xff]
    %v60 = vld [vmem:[#allocation5 + $0x90] sm:$0xff]
    %v61 = vld [vmem:[#allocation5 + $0x98] sm:$0xff]
    %v62 = vld [vmem:[#allocation5 + $0xa8] sm:$0xff]
    %v63 = vld [vmem:[#allocation5 + $0xb0] sm:$0xff]
    %v64 = vld [vmem:[#allocation5 + $0xa0] sm:$0x1]
    %v65 = vld [vmem:[#allocation5 + $0xb8] sm:$0x1]
    %v66 = vld [vmem:[#allocation5 + $0x30] sm:$0x1]
    %v67 = vperm.slane %v66, 0
    %v68 = vld [vmem:[#allocation5 + $0x78] sm:$0x1]
    %v69 = vperm.slane %v68, 0
    %v70 = vld [vmem:[#allocation2] sm:$0xff]
    %v71 = vld [vmem:[#allocation2 + $0x8] sm:$0xff]
    %vm72 = vcmask 261120
    %v74 = vsel %vm72, 0.0, 0
    %76 = vmatpush.msra.mxu0 0.0
    %77 = vmatpush.msra.mxu0 0.0
    %78 = vmatpush.msra.mxu0 0.0
    %79 = vmatpush.msra.mxu0 0.0
    %80 = vmatpush.msra.mxu0 0.0
    %81 = vmatpush.msra.mxu0 0.0
    %82 = vmatpush.msra.mxu0 0.0
    %83 = vmatpush.msra.mxu0 0.0
    %84 = vmatpush.msra.mxu0 0.0
    %85 = vmatpush.msra.mxu0 0.0
    %86 = vmatpush.msra.mxu0 0.0
    %87 = vmatpush.msra.mxu0 0.0
    %88 = vmatpush.msra.mxu0 %v49
    %89 = vmatpush.msra.mxu0 %v48
    %90 = vmatpush.msra.mxu0 %v47
    %91 = vmatpush.msra.mxu0 %v46
    %92 = vmatmul.f32.gmra.mxu0 %v74
    %v93 = vpop.f32.mrf.mxu0
    %v94 = vadd.f32 0.0, %v93
    %95 = vdwg.mxu0
    %v98 = vrot.slane %v71, 7
    %vm99 = vcmask 1041409
    %v100 = vsel %vm99, %v98, %v70
    %vm101 = vcmask 130048
    %v102 = vsel %vm101, %v100, 0
    %104 = vmatpush.msra.mxu0 0.0
    %105 = vmatpush.msra.mxu0 0.0
    %106 = vmatpush.msra.mxu0 0.0
    %107 = vmatpush.msra.mxu0 0.0
    %108 = vmatpush.msra.mxu0 0.0
    %109 = vmatpush.msra.mxu0 0.0
    %110 = vmatpush.msra.mxu0 0.0
    %111 = vmatpush.msra.mxu0 0.0
    %112 = vmatpush.msra.mxu0 0.0
    %113 = vmatpush.msra.mxu0 0.0
    %114 = vmatpush.msra.mxu0 0.0
    %115 = vmatpush.msra.mxu0 0.0
    %116 = vmatpush.msra.mxu0 0.0
    %117 = vmatpush.msra.mxu0 0.0
    %118 = vmatpush.msra.mxu0 %v45
    %119 = vmatpush.msra.mxu0 %v44
    %120 = vmatmul.f32.gmra.mxu0 %v102
    %v121 = vpop.f32.mrf.mxu0
    %v122 = vadd.f32 %v94, %v121
    %123 = vdwg.mxu0
    %v124 = vadd.f32 %v122, %v67
    %v125 = vxor.u32 %v124, 2147483648
    %v126 = vmul.f32 %v125, 1.442695
    %v127 = vpow.pop %v126
    %v128 = vadd.f32 %v127, 1.0
    %v129 = vrcp.pop %v128
    %v130 = vmul.f32 %v128, %v129
    %v131 = vsub.f32 1.0, %v130
    %v132 = vmul.f32 %v129, %v131
    %v133 = vadd.f32 %v129, %v132
    %vm134 = vweird.f32 %v128
    %vm135 = vweird.f32 %v129
    %vm136 = vmor %vm134, %vm135
    %v137 = vsel %vm136, %v129, %v133
    %v138 = vand.u32 2147483647, %v128
    %vm139 = vcmp.eq.f32.partialorder %v138, 8.507059e+37
    %v140 = vand.u32 %v128, 2147483648
    %v141 = vor.u32 1.1754944e-38, %v140
    %v142 = vsel %vm139, %v141, %v137
    %v143 = vmul.f32 1.0, %v142
    %v144 = vsub.f32 %v143, 1.0
    %146 = vrot.lane.b32.xlu0 %v124, 32
    %v147 = vpop.permute.xlu0 %146
    %v149 = vmul.f32 %v144, %v147
    %151 = vrot.lane.b32.xlu0 %v149, 64
    %v152 = vpop.permute.xlu0 %151
    %v154 = vadd.f32 %v124, %v152
    %v155 = vtanh.pop %v154
    %v156 = vsub.f32 1.0, %v143
    %158 = vrot.lane.b32.xlu0 %v155, 96
    %v159 = vpop.permute.xlu0 %158
    %v161 = vmul.f32 %v156, %v159
    %v162 = vmul.f32 %v143, 0.0
    %v163 = vadd.f32 %v161, %v162
    %v164 = vmax.f32 %v163, 0.0
    %165 = vmatpush.msra.mxu0 0.0
    %166 = vmatpush.msra.mxu0 0.0
    %167 = vmatpush.msra.mxu0 0.0
    %168 = vmatpush.msra.mxu0 0.0
    %169 = vmatpush.msra.mxu0 0.0
    %170 = vmatpush.msra.mxu0 0.0
    %171 = vmatpush.msra.mxu0 0.0
    %172 = vmatpush.msra.mxu0 0.0
    %173 = vmatpush.msra.mxu0 0.0
    %174 = vmatpush.msra.mxu0 0.0
    %175 = vmatpush.msra.mxu0 0.0
    %176 = vmatpush.msra.mxu0 0.0
    %177 = vmatpush.msra.mxu0 %v57
    %178 = vmatpush.msra.mxu0 %v56
    %179 = vmatpush.msra.mxu0 %v55
    %180 = vmatpush.msra.mxu0 %v54
    %181 = vmatmul.f32.gmra.mxu0 %v74
    %v182 = vpop.f32.mrf.mxu0
    %v183 = vadd.f32 0.0, %v182
    %184 = vdwg.mxu0
    %186 = vrot.lane.b32.xlu0 %v164, 96
    %v187 = vpop.permute.xlu0 %186
    %v188 = vsel %vm72, %v187, 0
    %190 = vmatpush.msra.mxu0 0.0
    %191 = vmatpush.msra.mxu0 0.0
    %192 = vmatpush.msra.mxu0 0.0
    %193 = vmatpush.msra.mxu0 0.0
    %194 = vmatpush.msra.mxu0 0.0
    %195 = vmatpush.msra.mxu0 0.0
    %196 = vmatpush.msra.mxu0 0.0
    %197 = vmatpush.msra.mxu0 0.0
    %198 = vmatpush.msra.mxu0 0.0
    %199 = vmatpush.msra.mxu0 0.0
    %200 = vmatpush.msra.mxu0 0.0
    %201 = vmatpush.msra.mxu0 0.0
    %202 = vmatpush.msra.mxu0 %v53
    %203 = vmatpush.msra.mxu0 %v52
    %204 = vmatpush.msra.mxu0 %v51
    %205 = vmatpush.msra.mxu0 %v50
    %206 = vmatmul.f32.gmra.mxu0 %v188
    %v207 = vpop.f32.mrf.mxu0
    %v208 = vadd.f32 %v183, %v207
    %209 = vdwg.mxu0
    %v210 = vadd.f32 %v208, %v69
    %v211 = vxor.u32 %v210, 2147483648
    %v212 = vmul.f32 %v211, 1.442695
    %v213 = vpow.pop %v212
    %v214 = vadd.f32 %v213, 1.0
    %v215 = vrcp.pop %v214
    %v216 = vmul.f32 %v214, %v215
    %v217 = vsub.f32 1.0, %v216
    %v218 = vmul.f32 %v215, %v217
    %v219 = vadd.f32 %v215, %v218
    %vm220 = vweird.f32 %v214
    %vm221 = vweird.f32 %v215
    %vm222 = vmor %vm220, %vm221
    %v223 = vsel %vm222, %v215, %v219
    %v224 = vand.u32 2147483647, %v214
    %vm225 = vcmp.eq.f32.partialorder %v224, 8.507059e+37
    %v226 = vand.u32 %v214, 2147483648
    %v227 = vor.u32 1.1754944e-38, %v226
    %v228 = vsel %vm225, %v227, %v223
    %v229 = vmul.f32 1.0, %v228
    %v230 = vsub.f32 %v229, 1.0
    %232 = vrot.lane.b32.xlu0 %v210, 32
    %v233 = vpop.permute.xlu0 %232
    %v235 = vmul.f32 %v230, %v233
    %237 = vrot.lane.b32.xlu0 %v235, 64
    %v238 = vpop.permute.xlu0 %237
    %v240 = vadd.f32 %v210, %v238
    %v241 = vtanh.pop %v240
    %v242 = vsub.f32 1.0, %v229
    %244 = vrot.lane.b32.xlu0 %v241, 96
    %v245 = vpop.permute.xlu0 %244
    %v247 = vmul.f32 %v242, %v245
    %v248 = vmul.f32 %v229, 0.0
    %v249 = vadd.f32 %v247, %v248
    %251 = vrot.lane.b32.xlu0 %v163, 96
    %v252 = vpop.permute.xlu0 %251
    %v253 = vsel %vm72, %v252, 0
    %255 = vmatpush.msra.mxu0 0.0
    %256 = vmatpush.msra.mxu0 0.0
    %257 = vmatpush.msra.mxu0 0.0
    %258 = vmatpush.msra.mxu0 0.0
    %259 = vmatpush.msra.mxu0 0.0
    %260 = vmatpush.msra.mxu0 0.0
    %261 = vmatpush.msra.mxu0 0.0
    %262 = vmatpush.msra.mxu0 0.0
    %263 = vmatpush.msra.mxu0 0.0
    %264 = vmatpush.msra.mxu0 0.0
    %265 = vmatpush.msra.mxu0 0.0
    %266 = vmatpush.msra.mxu0 0.0
    %267 = vmatpush.msra.mxu0 %v49
    %268 = vmatpush.msra.mxu0 %v48
    %269 = vmatpush.msra.mxu0 %v47
    %270 = vmatpush.msra.mxu0 %v46
    %271 = vmatmul.f32.gmra.mxu0 %v253
    %v272 = vpop.f32.mrf.mxu0
    %v273 = vadd.f32 0.0, %v272
    %274 = vdwg.mxu0
    %v275 = vrot.slane %v70, 1
    %v276 = vsel %vm99, %v71, %v275
    %v277 = vsel %vm101, %v276, 0
    %279 = vmatpush.msra.mxu0 0.0
    %280 = vmatpush.msra.mxu0 0.0
    %281 = vmatpush.msra.mxu0 0.0
    %282 = vmatpush.msra.mxu0 0.0
    %283 = vmatpush.msra.mxu0 0.0
    %284 = vmatpush.msra.mxu0 0.0
    %285 = vmatpush.msra.mxu0 0.0
    %286 = vmatpush.msra.mxu0 0.0
    %287 = vmatpush.msra.mxu0 0.0
    %288 = vmatpush.msra.mxu0 0.0
    %289 = vmatpush.msra.mxu0 0.0
    %290 = vmatpush.msra.mxu0 0.0
    %291 = vmatpush.msra.mxu0 0.0
    %292 = vmatpush.msra.mxu0 0.0
    %293 = vmatpush.msra.mxu0 %v45
    %294 = vmatpush.msra.mxu0 %v44
    %295 = vmatmul.f32.gmra.mxu0 %v277
    %v296 = vpop.f32.mrf.mxu0
    %v297 = vadd.f32 %v273, %v296
    %298 = vdwg.mxu0
    %v299 = vadd.f32 %v297, %v67
    %v300 = vxor.u32 %v299, 2147483648
    %v301 = vmul.f32 %v300, 1.442695
    %v302 = vpow.pop %v301
    %v303 = vadd.f32 %v302, 1.0
    %v304 = vrcp.pop %v303
    %v305 = vmul.f32 %v303, %v304
    %v306 = vsub.f32 1.0, %v305
    %v307 = vmul.f32 %v304, %v306
    %v308 = vadd.f32 %v304, %v307
    %vm309 = vweird.f32 %v303
    %vm310 = vweird.f32 %v304
    %vm311 = vmor %vm309, %vm310
    %v312 = vsel %vm311, %v304, %v308
    %v313 = vand.u32 2147483647, %v303
    %vm314 = vcmp.eq.f32.partialorder %v313, 8.507059e+37
    %v315 = vand.u32 %v303, 2147483648
    %v316 = vor.u32 1.1754944e-38, %v315
    %v317 = vsel %vm314, %v316, %v312
    %v318 = vmul.f32 1.0, %v317
    %v319 = vsub.f32 %v318, 1.0
    %321 = vrot.lane.b32.xlu0 %v299, 32
    %v322 = vpop.permute.xlu0 %321
    %v324 = vmul.f32 %v319, %v322
    %326 = vrot.lane.b32.xlu0 %v324, 64
    %v327 = vpop.permute.xlu0 %326
    %v329 = vadd.f32 %v299, %v327
    %v330 = vtanh.pop %v329
    %v331 = vsub.f32 1.0, %v318
    %333 = vrot.lane.b32.xlu0 %v330, 96
    %v334 = vpop.permute.xlu0 %333
    %v336 = vmul.f32 %v331, %v334
    %v337 = vmul.f32 %v318, %v163
    %v338 = vadd.f32 %v336, %v337
    %v339 = vmax.f32 %v338, 0.0
    %341 = vrot.lane.b32.xlu0 %v249, 96
    %v342 = vpop.permute.xlu0 %341
    %v343 = vsel %vm72, %v342, 0
    %345 = vmatpush.msra.mxu0 0.0
    %346 = vmatpush.msra.mxu0 0.0
    %347 = vmatpush.msra.mxu0 0.0
    %348 = vmatpush.msra.mxu0 0.0
    %349 = vmatpush.msra.mxu0 0.0
    %350 = vmatpush.msra.mxu0 0.0
    %351 = vmatpush.msra.mxu0 0.0
    %352 = vmatpush.msra.mxu0 0.0
    %353 = vmatpush.msra.mxu0 0.0
    %354 = vmatpush.msra.mxu0 0.0
    %355 = vmatpush.msra.mxu0 0.0
    %356 = vmatpush.msra.mxu0 0.0
    %357 = vmatpush.msra.mxu0 %v57
    %358 = vmatpush.msra.mxu0 %v56
    %359 = vmatpush.msra.mxu0 %v55
    %360 = vmatpush.msra.mxu0 %v54
    %361 = vmatmul.f32.gmra.mxu0 %v343
    %v362 = vpop.f32.mrf.mxu0
    %v363 = vadd.f32 0.0, %v362
    %364 = vdwg.mxu0
    %366 = vrot.lane.b32.xlu0 %v339, 96
    %v367 = vpop.permute.xlu0 %366
    %v368 = vsel %vm72, %v367, 0
    %370 = vmatpush.msra.mxu0 0.0
    %371 = vmatpush.msra.mxu0 0.0
    %372 = vmatpush.msra.mxu0 0.0
    %373 = vmatpush.msra.mxu0 0.0
    %374 = vmatpush.msra.mxu0 0.0
    %375 = vmatpush.msra.mxu0 0.0
    %376 = vmatpush.msra.mxu0 0.0
    %377 = vmatpush.msra.mxu0 0.0
    %378 = vmatpush.msra.mxu0 0.0
    %379 = vmatpush.msra.mxu0 0.0
    %380 = vmatpush.msra.mxu0 0.0
    %381 = vmatpush.msra.mxu0 0.0
    %382 = vmatpush.msra.mxu0 %v53
    %383 = vmatpush.msra.mxu0 %v52
    %384 = vmatpush.msra.mxu0 %v51
    %385 = vmatpush.msra.mxu0 %v50
    %386 = vmatmul.f32.gmra.mxu0 %v368
    %v387 = vpop.f32.mrf.mxu0
    %v388 = vadd.f32 %v363, %v387
    %389 = vdwg.mxu0
    %v390 = vadd.f32 %v388, %v69
    %v391 = vxor.u32 %v390, 2147483648
    %v392 = vmul.f32 %v391, 1.442695
    %v393 = vpow.pop %v392
    %v394 = vadd.f32 %v393, 1.0
    %v395 = vrcp.pop %v394
    %v396 = vmul.f32 %v394, %v395
    %v397 = vsub.f32 1.0, %v396
    %v398 = vmul.f32 %v395, %v397
    %v399 = vadd.f32 %v395, %v398
    %vm400 = vweird.f32 %v394
    %vm401 = vweird.f32 %v395
    %vm402 = vmor %vm400, %vm401
    %v403 = vsel %vm402, %v395, %v399
    %v404 = vand.u32 2147483647, %v394
    %vm405 = vcmp.eq.f32.partialorder %v404, 8.507059e+37
    %v406 = vand.u32 %v394, 2147483648
    %v407 = vor.u32 1.1754944e-38, %v406
    %v408 = vsel %vm405, %v407, %v403
    %v409 = vmul.f32 1.0, %v408
    %v410 = vsub.f32 %v409, 1.0
    %412 = vrot.lane.b32.xlu0 %v390, 32
    %v413 = vpop.permute.xlu0 %412
    %v415 = vmul.f32 %v410, %v413
    %417 = vrot.lane.b32.xlu0 %v415, 64
    %v418 = vpop.permute.xlu0 %417
    %v420 = vadd.f32 %v390, %v418
    %v421 = vtanh.pop %v420
    %v422 = vsub.f32 1.0, %v409
    %424 = vrot.lane.b32.xlu0 %v421, 96
    %v425 = vpop.permute.xlu0 %424
    %v427 = vmul.f32 %v422, %v425
    %v428 = vmul.f32 %v409, %v249
    %v429 = vadd.f32 %v427, %v428
    %431 = vrot.lane.b32.xlu0 %v338, 96
    %v432 = vpop.permute.xlu0 %431
    %v433 = vsel %vm72, %v432, 0
    %435 = vmatpush.msra.mxu0 0.0
    %436 = vmatpush.msra.mxu0 0.0
    %437 = vmatpush.msra.mxu0 0.0
    %438 = vmatpush.msra.mxu0 0.0
    %439 = vmatpush.msra.mxu0 0.0
    %440 = vmatpush.msra.mxu0 0.0
    %441 = vmatpush.msra.mxu0 0.0
    %442 = vmatpush.msra.mxu0 0.0
    %443 = vmatpush.msra.mxu0 0.0
    %444 = vmatpush.msra.mxu0 0.0
    %445 = vmatpush.msra.mxu0 0.0
    %446 = vmatpush.msra.mxu0 0.0
    %447 = vmatpush.msra.mxu0 %v49
    %448 = vmatpush.msra.mxu0 %v48
    %449 = vmatpush.msra.mxu0 %v47
    %450 = vmatpush.msra.mxu0 %v46
    %451 = vmatmul.f32.gmra.mxu0 %v433
    %v452 = vpop.f32.mrf.mxu0
    %v453 = vadd.f32 0.0, %v452
    %454 = vdwg.mxu0
    %v455 = vrot.slane %v70, 2
    %v456 = vrot.slane %v71, 1
    %v457 = vsel %vm99, %v456, %v455
    %v458 = vsel %vm101, %v457, 0
    %460 = vmatpush.msra.mxu0 0.0
    %461 = vmatpush.msra.mxu0 0.0
    %462 = vmatpush.msra.mxu0 0.0
    %463 = vmatpush.msra.mxu0 0.0
    %464 = vmatpush.msra.mxu0 0.0
    %465 = vmatpush.msra.mxu0 0.0
    %466 = vmatpush.msra.mxu0 0.0
    %467 = vmatpush.msra.mxu0 0.0
    %468 = vmatpush.msra.mxu0 0.0
    %469 = vmatpush.msra.mxu0 0.0
    %470 = vmatpush.msra.mxu0 0.0
    %471 = vmatpush.msra.mxu0 0.0
    %472 = vmatpush.msra.mxu0 0.0
    %473 = vmatpush.msra.mxu0 0.0
    %474 = vmatpush.msra.mxu0 %v45
    %475 = vmatpush.msra.mxu0 %v44
    %476 = vmatmul.f32.gmra.mxu0 %v458
    %v477 = vpop.f32.mrf.mxu0
    %v478 = vadd.f32 %v453, %v477
    %479 = vdwg.mxu0
    %v480 = vadd.f32 %v478, %v67
    %v481 = vxor.u32 %v480, 2147483648
    %v482 = vmul.f32 %v481, 1.442695
    %v483 = vpow.pop %v482
    %v484 = vadd.f32 %v483, 1.0
    %v485 = vrcp.pop %v484
    %v486 = vmul.f32 %v484, %v485
    %v487 = vsub.f32 1.0, %v486
    %v488 = vmul.f32 %v485, %v487
    %v489 = vadd.f32 %v485, %v488
    %vm490 = vweird.f32 %v484
    %vm491 = vweird.f32 %v485
    %vm492 = vmor %vm490, %vm491
    %v493 = vsel %vm492, %v485, %v489
    %v494 = vand.u32 2147483647, %v484
    %vm495 = vcmp.eq.f32.partialorder %v494, 8.507059e+37
    %v496 = vand.u32 %v484, 2147483648
    %v497 = vor.u32 1.1754944e-38, %v496
    %v498 = vsel %vm495, %v497, %v493
    %v499 = vmul.f32 1.0, %v498
    %v500 = vsub.f32 %v499, 1.0
    %502 = vrot.lane.b32.xlu0 %v480, 32
    %v503 = vpop.permute.xlu0 %502
    %v505 = vmul.f32 %v500, %v503
    %507 = vrot.lane.b32.xlu0 %v505, 64
    %v508 = vpop.permute.xlu0 %507
    %v510 = vadd.f32 %v480, %v508
    %v511 = vtanh.pop %v510
    %v512 = vsub.f32 1.0, %v499
    %514 = vrot.lane.b32.xlu0 %v511, 96
    %v515 = vpop.permute.xlu0 %514
    %v517 = vmul.f32 %v512, %v515
    %v518 = vmul.f32 %v499, %v338
    %v519 = vadd.f32 %v517, %v518
    %v520 = vmax.f32 %v519, 0.0
    %522 = vrot.lane.b32.xlu0 %v429, 96
    %v523 = vpop.permute.xlu0 %522
    %v524 = vsel %vm72, %v523, 0
    %526 = vmatpush.msra.mxu0 0.0
    %527 = vmatpush.msra.mxu0 0.0
    %528 = vmatpush.msra.mxu0 0.0
    %529 = vmatpush.msra.mxu0 0.0
    %530 = vmatpush.msra.mxu0 0.0
    %531 = vmatpush.msra.mxu0 0.0
    %532 = vmatpush.msra.mxu0 0.0
    %533 = vmatpush.msra.mxu0 0.0
    %534 = vmatpush.msra.mxu0 0.0
    %535 = vmatpush.msra.mxu0 0.0
    %536 = vmatpush.msra.mxu0 0.0
    %537 = vmatpush.msra.mxu0 0.0
    %538 = vmatpush.msra.mxu0 %v57
    %539 = vmatpush.msra.mxu0 %v56
    %540 = vmatpush.msra.mxu0 %v55
    %541 = vmatpush.msra.mxu0 %v54
    %542 = vmatmul.f32.gmra.mxu0 %v524
    %v543 = vpop.f32.mrf.mxu0
    %v544 = vadd.f32 0.0, %v543
    %545 = vdwg.mxu0
    %547 = vrot.lane.b32.xlu0 %v520, 96
    %v548 = vpop.permute.xlu0 %547
    %v549 = vsel %vm72, %v548, 0
    %551 = vmatpush.msra.mxu0 0.0
    %552 = vmatpush.msra.mxu0 0.0
    %553 = vmatpush.msra.mxu0 0.0
    %554 = vmatpush.msra.mxu0 0.0
    %555 = vmatpush.msra.mxu0 0.0
    %556 = vmatpush.msra.mxu0 0.0
    %557 = vmatpush.msra.mxu0 0.0
    %558 = vmatpush.msra.mxu0 0.0
    %559 = vmatpush.msra.mxu0 0.0
    %560 = vmatpush.msra.mxu0 0.0
    %561 = vmatpush.msra.mxu0 0.0
    %562 = vmatpush.msra.mxu0 0.0
    %563 = vmatpush.msra.mxu0 %v53
    %564 = vmatpush.msra.mxu0 %v52
    %565 = vmatpush.msra.mxu0 %v51
    %566 = vmatpush.msra.mxu0 %v50
    %567 = vmatmul.f32.gmra.mxu0 %v549
    %v568 = vpop.f32.mrf.mxu0
    %v569 = vadd.f32 %v544, %v568
    %570 = vdwg.mxu0
    %v571 = vadd.f32 %v569, %v69
    %v572 = vxor.u32 %v571, 2147483648
    %v573 = vmul.f32 %v572, 1.442695
    %v574 = vpow.pop %v573
    %v575 = vadd.f32 %v574, 1.0
    %v576 = vrcp.pop %v575
    %v577 = vmul.f32 %v575, %v576
    %v578 = vsub.f32 1.0, %v577
    %v579 = vmul.f32 %v576, %v578
    %v580 = vadd.f32 %v576, %v579
    %vm581 = vweird.f32 %v575
    %vm582 = vweird.f32 %v576
    %vm583 = vmor %vm581, %vm582
    %v584 = vsel %vm583, %v576, %v580
    %v585 = vand.u32 2147483647, %v575
    %vm586 = vcmp.eq.f32.partialorder %v585, 8.507059e+37
    %v587 = vand.u32 %v575, 2147483648
    %v588 = vor.u32 1.1754944e-38, %v587
    %v589 = vsel %vm586, %v588, %v584
    %v590 = vmul.f32 1.0, %v589
    %v591 = vsub.f32 %v590, 1.0
    %593 = vrot.lane.b32.xlu0 %v571, 32
    %v594 = vpop.permute.xlu0 %593
    %v596 = vmul.f32 %v591, %v594
    %598 = vrot.lane.b32.xlu0 %v596, 64
    %v599 = vpop.permute.xlu0 %598
    %v601 = vadd.f32 %v571, %v599
    %v602 = vtanh.pop %v601
    %v603 = vsub.f32 1.0, %v590
    %605 = vrot.lane.b32.xlu0 %v602, 96
    %v606 = vpop.permute.xlu0 %605
    %v608 = vmul.f32 %v603, %v606
    %v609 = vmul.f32 %v590, %v429
    %v610 = vadd.f32 %v608, %v609
    %612 = vrot.lane.b32.xlu0 %v519, 96
    %v613 = vpop.permute.xlu0 %612
    %v614 = vsel %vm72, %v613, 0
    %616 = vmatpush.msra.mxu0 0.0
    %617 = vmatpush.msra.mxu0 0.0
    %618 = vmatpush.msra.mxu0 0.0
    %619 = vmatpush.msra.mxu0 0.0
    %620 = vmatpush.msra.mxu0 0.0
    %621 = vmatpush.msra.mxu0 0.0
    %622 = vmatpush.msra.mxu0 0.0
    %623 = vmatpush.msra.mxu0 0.0
    %624 = vmatpush.msra.mxu0 0.0
    %625 = vmatpush.msra.mxu0 0.0
    %626 = vmatpush.msra.mxu0 0.0
    %627 = vmatpush.msra.mxu0 0.0
    %628 = vmatpush.msra.mxu0 %v49
    %629 = vmatpush.msra.mxu0 %v48
    %630 = vmatpush.msra.mxu0 %v47
    %631 = vmatpush.msra.mxu0 %v46
    %632 = vmatmul.f32.gmra.mxu0 %v614
    %v633 = vpop.f32.mrf.mxu0
    %v634 = vadd.f32 0.0, %v633
    %635 = vdwg.mxu0
    %v636 = vrot.slane %v70, 3
    %v637 = vrot.slane %v71, 2
    %v638 = vsel %vm99, %v637, %v636
    %v639 = vsel %vm101, %v638, 0
    %641 = vmatpush.msra.mxu0 0.0
    %642 = vmatpush.msra.mxu0 0.0
    %643 = vmatpush.msra.mxu0 0.0
    %644 = vmatpush.msra.mxu0 0.0
    %645 = vmatpush.msra.mxu0 0.0
    %646 = vmatpush.msra.mxu0 0.0
    %647 = vmatpush.msra.mxu0 0.0
    %648 = vmatpush.msra.mxu0 0.0
    %649 = vmatpush.msra.mxu0 0.0
    %650 = vmatpush.msra.mxu0 0.0
    %651 = vmatpush.msra.mxu0 0.0
    %652 = vmatpush.msra.mxu0 0.0
    %653 = vmatpush.msra.mxu0 0.0
    %654 = vmatpush.msra.mxu0 0.0
    %655 = vmatpush.msra.mxu0 %v45
    %656 = vmatpush.msra.mxu0 %v44
    %657 = vmatmul.f32.gmra.mxu0 %v639
    %v658 = vpop.f32.mrf.mxu0
    %v659 = vadd.f32 %v634, %v658
    %660 = vdwg.mxu0
    %v661 = vadd.f32 %v659, %v67
    %v662 = vxor.u32 %v661, 2147483648
    %v663 = vmul.f32 %v662, 1.442695
    %v664 = vpow.pop %v663
    %v665 = vadd.f32 %v664, 1.0
    %v666 = vrcp.pop %v665
    %v667 = vmul.f32 %v665, %v666
    %v668 = vsub.f32 1.0, %v667
    %v669 = vmul.f32 %v666, %v668
    %v670 = vadd.f32 %v666, %v669
    %vm671 = vweird.f32 %v665
    %vm672 = vweird.f32 %v666
    %vm673 = vmor %vm671, %vm672
    %v674 = vsel %vm673, %v666, %v670
    %v675 = vand.u32 2147483647, %v665
    %vm676 = vcmp.eq.f32.partialorder %v675, 8.507059e+37
    %v677 = vand.u32 %v665, 2147483648
    %v678 = vor.u32 1.1754944e-38, %v677
    %v679 = vsel %vm676, %v678, %v674
    %v680 = vmul.f32 1.0, %v679
    %v681 = vsub.f32 %v680, 1.0
    %683 = vrot.lane.b32.xlu0 %v661, 32
    %v684 = vpop.permute.xlu0 %683
    %v686 = vmul.f32 %v681, %v684
    %688 = vrot.lane.b32.xlu0 %v686, 64
    %v689 = vpop.permute.xlu0 %688
    %v691 = vadd.f32 %v661, %v689
    %v692 = vtanh.pop %v691
    %v693 = vsub.f32 1.0, %v680
    %695 = vrot.lane.b32.xlu0 %v692, 96
    %v696 = vpop.permute.xlu0 %695
    %v698 = vmul.f32 %v693, %v696
    %v699 = vmul.f32 %v680, %v519
    %v700 = vadd.f32 %v698, %v699
    %v701 = vmax.f32 %v700, 0.0
    %703 = vrot.lane.b32.xlu0 %v610, 96
    %v704 = vpop.permute.xlu0 %703
    %v705 = vsel %vm72, %v704, 0
    %707 = vmatpush.msra.mxu0 0.0
    %708 = vmatpush.msra.mxu0 0.0
    %709 = vmatpush.msra.mxu0 0.0
    %710 = vmatpush.msra.mxu0 0.0
    %711 = vmatpush.msra.mxu0 0.0
    %712 = vmatpush.msra.mxu0 0.0
    %713 = vmatpush.msra.mxu0 0.0
    %714 = vmatpush.msra.mxu0 0.0
    %715 = vmatpush.msra.mxu0 0.0
    %716 = vmatpush.msra.mxu0 0.0
    %717 = vmatpush.msra.mxu0 0.0
    %718 = vmatpush.msra.mxu0 0.0
    %719 = vmatpush.msra.mxu0 %v57
    %720 = vmatpush.msra.mxu0 %v56
    %721 = vmatpush.msra.mxu0 %v55
    %722 = vmatpush.msra.mxu0 %v54
    %723 = vmatmul.f32.gmra.mxu0 %v705
    %v724 = vpop.f32.mrf.mxu0
    %v725 = vadd.f32 0.0, %v724
    %726 = vdwg.mxu0
    %728 = vrot.lane.b32.xlu0 %v701, 96
    %v729 = vpop.permute.xlu0 %728
    %v730 = vsel %vm72, %v729, 0
    %732 = vmatpush.msra.mxu0 0.0
    %733 = vmatpush.msra.mxu0 0.0
    %734 = vmatpush.msra.mxu0 0.0
    %735 = vmatpush.msra.mxu0 0.0
    %736 = vmatpush.msra.mxu0 0.0
    %737 = vmatpush.msra.mxu0 0.0
    %738 = vmatpush.msra.mxu0 0.0
    %739 = vmatpush.msra.mxu0 0.0
    %740 = vmatpush.msra.mxu0 0.0
    %741 = vmatpush.msra.mxu0 0.0
    %742 = vmatpush.msra.mxu0 0.0
    %743 = vmatpush.msra.mxu0 0.0
    %744 = vmatpush.msra.mxu0 %v53
    %745 = vmatpush.msra.mxu0 %v52
    %746 = vmatpush.msra.mxu0 %v51
    %747 = vmatpush.msra.mxu0 %v50
    %748 = vmatmul.f32.gmra.mxu0 %v730
    %v749 = vpop.f32.mrf.mxu0
    %v750 = vadd.f32 %v725, %v749
    %751 = vdwg.mxu0
    %v752 = vadd.f32 %v750, %v69
    %v753 = vxor.u32 %v752, 2147483648
    %v754 = vmul.f32 %v753, 1.442695
    %v755 = vpow.pop %v754
    %v756 = vadd.f32 %v755, 1.0
    %v757 = vrcp.pop %v756
    %v758 = vmul.f32 %v756, %v757
    %v759 = vsub.f32 1.0, %v758
    %v760 = vmul.f32 %v757, %v759
    %v761 = vadd.f32 %v757, %v760
    %vm762 = vweird.f32 %v756
    %vm763 = vweird.f32 %v757
    %vm764 = vmor %vm762, %vm763
    %v765 = vsel %vm764, %v757, %v761
    %v766 = vand.u32 2147483647, %v756
    %vm767 = vcmp.eq.f32.partialorder %v766, 8.507059e+37
    %v768 = vand.u32 %v756, 2147483648
    %v769 = vor.u32 1.1754944e-38, %v768
    %v770 = vsel %vm767, %v769, %v765
    %v771 = vmul.f32 1.0, %v770
    %v772 = vsub.f32 %v771, 1.0
    %774 = vrot.lane.b32.xlu0 %v752, 32
    %v775 = vpop.permute.xlu0 %774
    %v777 = vmul.f32 %v772, %v775
    %779 = vrot.lane.b32.xlu0 %v777, 64
    %v780 = vpop.permute.xlu0 %779
    %v782 = vadd.f32 %v752, %v780
    %v783 = vtanh.pop %v782
    %v784 = vsub.f32 1.0, %v771
    %786 = vrot.lane.b32.xlu0 %v783, 96
    %v787 = vpop.permute.xlu0 %786
    %v789 = vmul.f32 %v784, %v787
    %v790 = vmul.f32 %v771, %v610
    %v791 = vadd.f32 %v789, %v790
    %793 = vrot.lane.b32.xlu0 %v700, 96
    %v794 = vpop.permute.xlu0 %793
    %v795 = vsel %vm72, %v794, 0
    %797 = vmatpush.msra.mxu0 0.0
    %798 = vmatpush.msra.mxu0 0.0
    %799 = vmatpush.msra.mxu0 0.0
    %800 = vmatpush.msra.mxu0 0.0
    %801 = vmatpush.msra.mxu0 0.0
    %802 = vmatpush.msra.mxu0 0.0
    %803 = vmatpush.msra.mxu0 0.0
    %804 = vmatpush.msra.mxu0 0.0
    %805 = vmatpush.msra.mxu0 0.0
    %806 = vmatpush.msra.mxu0 0.0
    %807 = vmatpush.msra.mxu0 0.0
    %808 = vmatpush.msra.mxu0 0.0
    %809 = vmatpush.msra.mxu0 %v49
    %810 = vmatpush.msra.mxu0 %v48
    %811 = vmatpush.msra.mxu0 %v47
    %812 = vmatpush.msra.mxu0 %v46
    %813 = vmatmul.f32.gmra.mxu0 %v795
    %v814 = vpop.f32.mrf.mxu0
    %v815 = vadd.f32 0.0, %v814
    %816 = vdwg.mxu0
    %v817 = vrot.slane %v70, 4
    %v818 = vrot.slane %v71, 3
    %v819 = vsel %vm99, %v818, %v817
    %v820 = vsel %vm101, %v819, 0
    %822 = vmatpush.msra.mxu0 0.0
    %823 = vmatpush.msra.mxu0 0.0
    %824 = vmatpush.msra.mxu0 0.0
    %825 = vmatpush.msra.mxu0 0.0
    %826 = vmatpush.msra.mxu0 0.0
    %827 = vmatpush.msra.mxu0 0.0
    %828 = vmatpush.msra.mxu0 0.0
    %829 = vmatpush.msra.mxu0 0.0
    %830 = vmatpush.msra.mxu0 0.0
    %831 = vmatpush.msra.mxu0 0.0
    %832 = vmatpush.msra.mxu0 0.0
    %833 = vmatpush.msra.mxu0 0.0
    %834 = vmatpush.msra.mxu0 0.0
    %835 = vmatpush.msra.mxu0 0.0
    %836 = vmatpush.msra.mxu0 %v45
    %837 = vmatpush.msra.mxu0 %v44
    %838 = vmatmul.f32.gmra.mxu0 %v820
    %v839 = vpop.f32.mrf.mxu0
    %v840 = vadd.f32 %v815, %v839
    %841 = vdwg.mxu0
    %v842 = vadd.f32 %v840, %v67
    %v843 = vxor.u32 %v842, 2147483648
    %v844 = vmul.f32 %v843, 1.442695
    %v845 = vpow.pop %v844
    %v846 = vadd.f32 %v845, 1.0
    %v847 = vrcp.pop %v846
    %v848 = vmul.f32 %v846, %v847
    %v849 = vsub.f32 1.0, %v848
    %v850 = vmul.f32 %v847, %v849
    %v851 = vadd.f32 %v847, %v850
    %vm852 = vweird.f32 %v846
    %vm853 = vweird.f32 %v847
    %vm854 = vmor %vm852, %vm853
    %v855 = vsel %vm854, %v847, %v851
    %v856 = vand.u32 2147483647, %v846
    %vm857 = vcmp.eq.f32.partialorder %v856, 8.507059e+37
    %v858 = vand.u32 %v846, 2147483648
    %v859 = vor.u32 1.1754944e-38, %v858
    %v860 = vsel %vm857, %v859, %v855
    %v861 = vmul.f32 1.0, %v860
    %v862 = vsub.f32 %v861, 1.0
    %864 = vrot.lane.b32.xlu0 %v842, 32
    %v865 = vpop.permute.xlu0 %864
    %v867 = vmul.f32 %v862, %v865
    %869 = vrot.lane.b32.xlu0 %v867, 64
    %v870 = vpop.permute.xlu0 %869
    %v872 = vadd.f32 %v842, %v870
    %v873 = vtanh.pop %v872
    %v874 = vsub.f32 1.0, %v861
    %876 = vrot.lane.b32.xlu0 %v873, 96
    %v877 = vpop.permute.xlu0 %876
    %v879 = vmul.f32 %v874, %v877
    %v880 = vmul.f32 %v861, %v700
    %v881 = vadd.f32 %v879, %v880
    %v882 = vmax.f32 %v881, 0.0
    %884 = vrot.lane.b32.xlu0 %v791, 96
    %v885 = vpop.permute.xlu0 %884
    %v886 = vsel %vm72, %v885, 0
    %888 = vmatpush.msra.mxu0 0.0
    %889 = vmatpush.msra.mxu0 0.0
    %890 = vmatpush.msra.mxu0 0.0
    %891 = vmatpush.msra.mxu0 0.0
    %892 = vmatpush.msra.mxu0 0.0
    %893 = vmatpush.msra.mxu0 0.0
    %894 = vmatpush.msra.mxu0 0.0
    %895 = vmatpush.msra.mxu0 0.0
    %896 = vmatpush.msra.mxu0 0.0
    %897 = vmatpush.msra.mxu0 0.0
    %898 = vmatpush.msra.mxu0 0.0
    %899 = vmatpush.msra.mxu0 0.0
    %900 = vmatpush.msra.mxu0 %v57
    %901 = vmatpush.msra.mxu0 %v56
    %902 = vmatpush.msra.mxu0 %v55
    %903 = vmatpush.msra.mxu0 %v54
    %904 = vmatmul.f32.gmra.mxu0 %v886
    %v905 = vpop.f32.mrf.mxu0
    %v906 = vadd.f32 0.0, %v905
    %907 = vdwg.mxu0
    %909 = vrot.lane.b32.xlu0 %v882, 96
    %v910 = vpop.permute.xlu0 %909
    %v911 = vsel %vm72, %v910, 0
    %913 = vmatpush.msra.mxu0 0.0
    %914 = vmatpush.msra.mxu0 0.0
    %915 = vmatpush.msra.mxu0 0.0
    %916 = vmatpush.msra.mxu0 0.0
    %917 = vmatpush.msra.mxu0 0.0
    %918 = vmatpush.msra.mxu0 0.0
    %919 = vmatpush.msra.mxu0 0.0
    %920 = vmatpush.msra.mxu0 0.0
    %921 = vmatpush.msra.mxu0 0.0
    %922 = vmatpush.msra.mxu0 0.0
    %923 = vmatpush.msra.mxu0 0.0
    %924 = vmatpush.msra.mxu0 0.0
    %925 = vmatpush.msra.mxu0 %v53
    %926 = vmatpush.msra.mxu0 %v52
    %927 = vmatpush.msra.mxu0 %v51
    %928 = vmatpush.msra.mxu0 %v50
    %929 = vmatmul.f32.gmra.mxu0 %v911
    %v930 = vpop.f32.mrf.mxu0
    %v931 = vadd.f32 %v906, %v930
    %932 = vdwg.mxu0
    %v933 = vadd.f32 %v931, %v69
    %v934 = vxor.u32 %v933, 2147483648
    %v935 = vmul.f32 %v934, 1.442695
    %v936 = vpow.pop %v935
    %v937 = vadd.f32 %v936, 1.0
    %v938 = vrcp.pop %v937
    %v939 = vmul.f32 %v937, %v938
    %v940 = vsub.f32 1.0, %v939
    %v941 = vmul.f32 %v938, %v940
    %v942 = vadd.f32 %v938, %v941
    %vm943 = vweird.f32 %v937
    %vm944 = vweird.f32 %v938
    %vm945 = vmor %vm943, %vm944
    %v946 = vsel %vm945, %v938, %v942
    %v947 = vand.u32 2147483647, %v937
    %vm948 = vcmp.eq.f32.partialorder %v947, 8.507059e+37
    %v949 = vand.u32 %v937, 2147483648
    %v950 = vor.u32 1.1754944e-38, %v949
    %v951 = vsel %vm948, %v950, %v946
    %v952 = vmul.f32 1.0, %v951
    %v953 = vsub.f32 %v952, 1.0
    %955 = vrot.lane.b32.xlu0 %v933, 32
    %v956 = vpop.permute.xlu0 %955
    %v958 = vmul.f32 %v953, %v956
    %960 = vrot.lane.b32.xlu0 %v958, 64
    %v961 = vpop.permute.xlu0 %960
    %v963 = vadd.f32 %v933, %v961
    %v964 = vtanh.pop %v963
    %v965 = vsub.f32 1.0, %v952
    %967 = vrot.lane.b32.xlu0 %v964, 96
    %v968 = vpop.permute.xlu0 %967
    %v970 = vmul.f32 %v965, %v968
    %v971 = vmul.f32 %v952, %v791
    %v972 = vadd.f32 %v970, %v971
    %974 = vrot.lane.b32.xlu0 %v881, 96
    %v975 = vpop.permute.xlu0 %974
    %v976 = vsel %vm72, %v975, 0
    %978 = vmatpush.msra.mxu0 0.0
    %979 = vmatpush.msra.mxu0 0.0
    %980 = vmatpush.msra.mxu0 0.0
    %981 = vmatpush.msra.mxu0 0.0
    %982 = vmatpush.msra.mxu0 0.0
    %983 = vmatpush.msra.mxu0 0.0
    %984 = vmatpush.msra.mxu0 0.0
    %985 = vmatpush.msra.mxu0 0.0
    %986 = vmatpush.msra.mxu0 0.0
    %987 = vmatpush.msra.mxu0 0.0
    %988 = vmatpush.msra.mxu0 0.0
    %989 = vmatpush.msra.mxu0 0.0
    %990 = vmatpush.msra.mxu0 %v49
    %991 = vmatpush.msra.mxu0 %v48
    %992 = vmatpush.msra.mxu0 %v47
    %993 = vmatpush.msra.mxu0 %v46
    %994 = vmatmul.f32.gmra.mxu0 %v976
    %v995 = vpop.f32.mrf.mxu0
    %v996 = vadd.f32 0.0, %v995
    %997 = vdwg.mxu0
    %v998 = vrot.slane %v70, 5
    %v999 = vrot.slane %v71, 4
    %v1000 = vsel %vm99, %v999, %v998
    %v1001 = vsel %vm101, %v1000, 0
    %1003 = vmatpush.msra.mxu0 0.0
    %1004 = vmatpush.msra.mxu0 0.0
    %1005 = vmatpush.msra.mxu0 0.0
    %1006 = vmatpush.msra.mxu0 0.0
    %1007 = vmatpush.msra.mxu0 0.0
    %1008 = vmatpush.msra.mxu0 0.0
    %1009 = vmatpush.msra.mxu0 0.0
    %1010 = vmatpush.msra.mxu0 0.0
    %1011 = vmatpush.msra.mxu0 0.0
    %1012 = vmatpush.msra.mxu0 0.0
    %1013 = vmatpush.msra.mxu0 0.0
    %1014 = vmatpush.msra.mxu0 0.0
    %1015 = vmatpush.msra.mxu0 0.0
    %1016 = vmatpush.msra.mxu0 0.0
    %1017 = vmatpush.msra.mxu0 %v45
    %1018 = vmatpush.msra.mxu0 %v44
    %1019 = vmatmul.f32.gmra.mxu0 %v1001
    %v1020 = vpop.f32.mrf.mxu0
    %v1021 = vadd.f32 %v996, %v1020
    %1022 = vdwg.mxu0
    %v1023 = vadd.f32 %v1021, %v67
    %v1024 = vxor.u32 %v1023, 2147483648
    %v1025 = vmul.f32 %v1024, 1.442695
    %v1026 = vpow.pop %v1025
    %v1027 = vadd.f32 %v1026, 1.0
    %v1028 = vrcp.pop %v1027
    %v1029 = vmul.f32 %v1027, %v1028
    %v1030 = vsub.f32 1.0, %v1029
    %v1031 = vmul.f32 %v1028, %v1030
    %v1032 = vadd.f32 %v1028, %v1031
    %vm1033 = vweird.f32 %v1027
    %vm1034 = vweird.f32 %v1028
    %vm1035 = vmor %vm1033, %vm1034
    %v1036 = vsel %vm1035, %v1028, %v1032
    %v1037 = vand.u32 2147483647, %v1027
    %vm1038 = vcmp.eq.f32.partialorder %v1037, 8.507059e+37
    %v1039 = vand.u32 %v1027, 2147483648
    %v1040 = vor.u32 1.1754944e-38, %v1039
    %v1041 = vsel %vm1038, %v1040, %v1036
    %v1042 = vmul.f32 1.0, %v1041
    %v1043 = vsub.f32 %v1042, 1.0
    %1045 = vrot.lane.b32.xlu0 %v1023, 32
    %v1046 = vpop.permute.xlu0 %1045
    %v1048 = vmul.f32 %v1043, %v1046
    %1050 = vrot.lane.b32.xlu0 %v1048, 64
    %v1051 = vpop.permute.xlu0 %1050
    %v1053 = vadd.f32 %v1023, %v1051
    %v1054 = vtanh.pop %v1053
    %v1055 = vsub.f32 1.0, %v1042
    %1057 = vrot.lane.b32.xlu0 %v1054, 96
    %v1058 = vpop.permute.xlu0 %1057
    %v1060 = vmul.f32 %v1055, %v1058
    %v1061 = vmul.f32 %v1042, %v881
    %v1062 = vadd.f32 %v1060, %v1061
    %v1063 = vmax.f32 %v1062, 0.0
    %1065 = vrot.lane.b32.xlu0 %v972, 96
    %v1066 = vpop.permute.xlu0 %1065
    %v1067 = vsel %vm72, %v1066, 0
    %1069 = vmatpush.msra.mxu0 0.0
    %1070 = vmatpush.msra.mxu0 0.0
    %1071 = vmatpush.msra.mxu0 0.0
    %1072 = vmatpush.msra.mxu0 0.0
    %1073 = vmatpush.msra.mxu0 0.0
    %1074 = vmatpush.msra.mxu0 0.0
    %1075 = vmatpush.msra.mxu0 0.0
    %1076 = vmatpush.msra.mxu0 0.0
    %1077 = vmatpush.msra.mxu0 0.0
    %1078 = vmatpush.msra.mxu0 0.0
    %1079 = vmatpush.msra.mxu0 0.0
    %1080 = vmatpush.msra.mxu0 0.0
    %1081 = vmatpush.msra.mxu0 %v57
    %1082 = vmatpush.msra.mxu0 %v56
    %1083 = vmatpush.msra.mxu0 %v55
    %1084 = vmatpush.msra.mxu0 %v54
    %1085 = vmatmul.f32.gmra.mxu0 %v1067
    %v1086 = vpop.f32.mrf.mxu0
    %v1087 = vadd.f32 0.0, %v1086
    %1088 = vdwg.mxu0
    %1090 = vrot.lane.b32.xlu0 %v1063, 96
    %v1091 = vpop.permute.xlu0 %1090
    %v1092 = vsel %vm72, %v1091, 0
    %1094 = vmatpush.msra.mxu0 0.0
    %1095 = vmatpush.msra.mxu0 0.0
    %1096 = vmatpush.msra.mxu0 0.0
    %1097 = vmatpush.msra.mxu0 0.0
    %1098 = vmatpush.msra.mxu0 0.0
    %1099 = vmatpush.msra.mxu0 0.0
    %1100 = vmatpush.msra.mxu0 0.0
    %1101 = vmatpush.msra.mxu0 0.0
    %1102 = vmatpush.msra.mxu0 0.0
    %1103 = vmatpush.msra.mxu0 0.0
    %1104 = vmatpush.msra.mxu0 0.0
    %1105 = vmatpush.msra.mxu0 0.0
    %1106 = vmatpush.msra.mxu0 %v53
    %1107 = vmatpush.msra.mxu0 %v52
    %1108 = vmatpush.msra.mxu0 %v51
    %1109 = vmatpush.msra.mxu0 %v50
    %1110 = vmatmul.f32.gmra.mxu0 %v1092
    %v1111 = vpop.f32.mrf.mxu0
    %v1112 = vadd.f32 %v1087, %v1111
    %1113 = vdwg.mxu0
    %v1114 = vadd.f32 %v1112, %v69
    %v1115 = vxor.u32 %v1114, 2147483648
    %v1116 = vmul.f32 %v1115, 1.442695
    %v1117 = vpow.pop %v1116
    %v1118 = vadd.f32 %v1117, 1.0
    %v1119 = vrcp.pop %v1118
    %v1120 = vmul.f32 %v1118, %v1119
    %v1121 = vsub.f32 1.0, %v1120
    %v1122 = vmul.f32 %v1119, %v1121
    %v1123 = vadd.f32 %v1119, %v1122
    %vm1124 = vweird.f32 %v1118
    %vm1125 = vweird.f32 %v1119
    %vm1126 = vmor %vm1124, %vm1125
    %v1127 = vsel %vm1126, %v1119, %v1123
    %v1128 = vand.u32 2147483647, %v1118
    %vm1129 = vcmp.eq.f32.partialorder %v1128, 8.507059e+37
    %v1130 = vand.u32 %v1118, 2147483648
    %v1131 = vor.u32 1.1754944e-38, %v1130
    %v1132 = vsel %vm1129, %v1131, %v1127
    %v1133 = vmul.f32 1.0, %v1132
    %v1134 = vsub.f32 %v1133, 1.0
    %1136 = vrot.lane.b32.xlu0 %v1114, 32
    %v1137 = vpop.permute.xlu0 %1136
    %v1139 = vmul.f32 %v1134, %v1137
    %1141 = vrot.lane.b32.xlu0 %v1139, 64
    %v1142 = vpop.permute.xlu0 %1141
    %v1144 = vadd.f32 %v1114, %v1142
    %v1145 = vtanh.pop %v1144
    %v1146 = vsub.f32 1.0, %v1133
    %1148 = vrot.lane.b32.xlu0 %v1145, 96
    %v1149 = vpop.permute.xlu0 %1148
    %v1151 = vmul.f32 %v1146, %v1149
    %v1152 = vmul.f32 %v1133, %v972
    %v1153 = vadd.f32 %v1151, %v1152
    %1155 = vrot.lane.b32.xlu0 %v1062, 96
    %v1156 = vpop.permute.xlu0 %1155
    %v1157 = vsel %vm72, %v1156, 0
    %1159 = vmatpush.msra.mxu0 0.0
    %1160 = vmatpush.msra.mxu0 0.0
    %1161 = vmatpush.msra.mxu0 0.0
    %1162 = vmatpush.msra.mxu0 0.0
    %1163 = vmatpush.msra.mxu0 0.0
    %1164 = vmatpush.msra.mxu0 0.0
    %1165 = vmatpush.msra.mxu0 0.0
    %1166 = vmatpush.msra.mxu0 0.0
    %1167 = vmatpush.msra.mxu0 0.0
    %1168 = vmatpush.msra.mxu0 0.0
    %1169 = vmatpush.msra.mxu0 0.0
    %1170 = vmatpush.msra.mxu0 0.0
    %1171 = vmatpush.msra.mxu0 %v49
    %1172 = vmatpush.msra.mxu0 %v48
    %1173 = vmatpush.msra.mxu0 %v47
    %1174 = vmatpush.msra.mxu0 %v46
    %1175 = vmatmul.f32.gmra.mxu0 %v1157
    %v1176 = vpop.f32.mrf.mxu0
    %v1177 = vadd.f32 0.0, %v1176
    %1178 = vdwg.mxu0
    %v1179 = vrot.slane %v70, 6
    %v1180 = vrot.slane %v71, 5
    %v1181 = vsel %vm99, %v1180, %v1179
    %v1182 = vsel %vm101, %v1181, 0
    %1184 = vmatpush.msra.mxu0 0.0
    %1185 = vmatpush.msra.mxu0 0.0
    %1186 = vmatpush.msra.mxu0 0.0
    %1187 = vmatpush.msra.mxu0 0.0
    %1188 = vmatpush.msra.mxu0 0.0
    %1189 = vmatpush.msra.mxu0 0.0
    %1190 = vmatpush.msra.mxu0 0.0
    %1191 = vmatpush.msra.mxu0 0.0
    %1192 = vmatpush.msra.mxu0 0.0
    %1193 = vmatpush.msra.mxu0 0.0
    %1194 = vmatpush.msra.mxu0 0.0
    %1195 = vmatpush.msra.mxu0 0.0
    %1196 = vmatpush.msra.mxu0 0.0
    %1197 = vmatpush.msra.mxu0 0.0
    %1198 = vmatpush.msra.mxu0 %v45
    %1199 = vmatpush.msra.mxu0 %v44
    %1200 = vmatmul.f32.gmra.mxu0 %v1182
    %v1201 = vpop.f32.mrf.mxu0
    %v1202 = vadd.f32 %v1177, %v1201
    %1203 = vdwg.mxu0
    %v1204 = vadd.f32 %v1202, %v67
    %v1205 = vxor.u32 %v1204, 2147483648
    %v1206 = vmul.f32 %v1205, 1.442695
    %v1207 = vpow.pop %v1206
    %v1208 = vadd.f32 %v1207, 1.0
    %v1209 = vrcp.pop %v1208
    %v1210 = vmul.f32 %v1208, %v1209
    %v1211 = vsub.f32 1.0, %v1210
    %v1212 = vmul.f32 %v1209, %v1211
    %v1213 = vadd.f32 %v1209, %v1212
    %vm1214 = vweird.f32 %v1208
    %vm1215 = vweird.f32 %v1209
    %vm1216 = vmor %vm1214, %vm1215
    %v1217 = vsel %vm1216, %v1209, %v1213
    %v1218 = vand.u32 2147483647, %v1208
    %vm1219 = vcmp.eq.f32.partialorder %v1218, 8.507059e+37
    %v1220 = vand.u32 %v1208, 2147483648
    %v1221 = vor.u32 1.1754944e-38, %v1220
    %v1222 = vsel %vm1219, %v1221, %v1217
    %v1223 = vmul.f32 1.0, %v1222
    %v1224 = vsub.f32 %v1223, 1.0
    %1226 = vrot.lane.b32.xlu0 %v1204, 32
    %v1227 = vpop.permute.xlu0 %1226
    %v1229 = vmul.f32 %v1224, %v1227
    %1231 = vrot.lane.b32.xlu0 %v1229, 64
    %v1232 = vpop.permute.xlu0 %1231
    %v1234 = vadd.f32 %v1204, %v1232
    %v1235 = vtanh.pop %v1234
    %v1236 = vsub.f32 1.0, %v1223
    %1238 = vrot.lane.b32.xlu0 %v1235, 96
    %v1239 = vpop.permute.xlu0 %1238
    %v1241 = vmul.f32 %v1236, %v1239
    %v1242 = vmul.f32 %v1223, %v1062
    %v1243 = vadd.f32 %v1241, %v1242
    %v1244 = vmax.f32 %v1243, 0.0
    %1246 = vrot.lane.b32.xlu0 %v1153, 96
    %v1247 = vpop.permute.xlu0 %1246
    %v1248 = vsel %vm72, %v1247, 0
    %1250 = vmatpush.msra.mxu0 0.0
    %1251 = vmatpush.msra.mxu0 0.0
    %1252 = vmatpush.msra.mxu0 0.0
    %1253 = vmatpush.msra.mxu0 0.0
    %1254 = vmatpush.msra.mxu0 0.0
    %1255 = vmatpush.msra.mxu0 0.0
    %1256 = vmatpush.msra.mxu0 0.0
    %1257 = vmatpush.msra.mxu0 0.0
    %1258 = vmatpush.msra.mxu0 0.0
    %1259 = vmatpush.msra.mxu0 0.0
    %1260 = vmatpush.msra.mxu0 0.0
    %1261 = vmatpush.msra.mxu0 0.0
    %1262 = vmatpush.msra.mxu0 %v57
    %1263 = vmatpush.msra.mxu0 %v56
    %1264 = vmatpush.msra.mxu0 %v55
    %1265 = vmatpush.msra.mxu0 %v54
    %1266 = vmatmul.f32.gmra.mxu0 %v1248
    %v1267 = vpop.f32.mrf.mxu0
    %v1268 = vadd.f32 0.0, %v1267
    %1269 = vdwg.mxu0
    %1271 = vrot.lane.b32.xlu0 %v1244, 96
    %v1272 = vpop.permute.xlu0 %1271
    %v1273 = vsel %vm72, %v1272, 0
    %1275 = vmatpush.msra.mxu0 0.0
    %1276 = vmatpush.msra.mxu0 0.0
    %1277 = vmatpush.msra.mxu0 0.0
    %1278 = vmatpush.msra.mxu0 0.0
    %1279 = vmatpush.msra.mxu0 0.0
    %1280 = vmatpush.msra.mxu0 0.0
    %1281 = vmatpush.msra.mxu0 0.0
    %1282 = vmatpush.msra.mxu0 0.0
    %1283 = vmatpush.msra.mxu0 0.0
    %1284 = vmatpush.msra.mxu0 0.0
    %1285 = vmatpush.msra.mxu0 0.0
    %1286 = vmatpush.msra.mxu0 0.0
    %1287 = vmatpush.msra.mxu0 %v53
    %1288 = vmatpush.msra.mxu0 %v52
    %1289 = vmatpush.msra.mxu0 %v51
    %1290 = vmatpush.msra.mxu0 %v50
    %1291 = vmatmul.f32.gmra.mxu0 %v1273
    %v1292 = vpop.f32.mrf.mxu0
    %v1293 = vadd.f32 %v1268, %v1292
    %1294 = vdwg.mxu0
    %v1295 = vadd.f32 %v1293, %v69
    %v1296 = vxor.u32 %v1295, 2147483648
    %v1297 = vmul.f32 %v1296, 1.442695
    %v1298 = vpow.pop %v1297
    %v1299 = vadd.f32 %v1298, 1.0
    %v1300 = vrcp.pop %v1299
    %v1301 = vmul.f32 %v1299, %v1300
    %v1302 = vsub.f32 1.0, %v1301
    %v1303 = vmul.f32 %v1300, %v1302
    %v1304 = vadd.f32 %v1300, %v1303
    %vm1305 = vweird.f32 %v1299
    %vm1306 = vweird.f32 %v1300
    %vm1307 = vmor %vm1305, %vm1306
    %v1308 = vsel %vm1307, %v1300, %v1304
    %v1309 = vand.u32 2147483647, %v1299
    %vm1310 = vcmp.eq.f32.partialorder %v1309, 8.507059e+37
    %v1311 = vand.u32 %v1299, 2147483648
    %v1312 = vor.u32 1.1754944e-38, %v1311
    %v1313 = vsel %vm1310, %v1312, %v1308
    %v1314 = vmul.f32 1.0, %v1313
    %v1315 = vsub.f32 %v1314, 1.0
    %1317 = vrot.lane.b32.xlu0 %v1295, 32
    %v1318 = vpop.permute.xlu0 %1317
    %v1320 = vmul.f32 %v1315, %v1318
    %1322 = vrot.lane.b32.xlu0 %v1320, 64
    %v1323 = vpop.permute.xlu0 %1322
    %v1325 = vadd.f32 %v1295, %v1323
    %v1326 = vtanh.pop %v1325
    %v1327 = vsub.f32 1.0, %v1314
    %1329 = vrot.lane.b32.xlu0 %v1326, 96
    %v1330 = vpop.permute.xlu0 %1329
    %v1332 = vmul.f32 %v1327, %v1330
    %v1333 = vmul.f32 %v1314, %v1153
    %v1334 = vadd.f32 %v1332, %v1333
    %1336 = vrot.lane.b32.xlu0 %v1243, 96
    %v1337 = vpop.permute.xlu0 %1336
    %v1338 = vsel %vm72, %v1337, 0
    %1340 = vmatpush.msra.mxu0 0.0
    %1341 = vmatpush.msra.mxu0 0.0
    %1342 = vmatpush.msra.mxu0 0.0
    %1343 = vmatpush.msra.mxu0 0.0
    %1344 = vmatpush.msra.mxu0 0.0
    %1345 = vmatpush.msra.mxu0 0.0
    %1346 = vmatpush.msra.mxu0 0.0
    %1347 = vmatpush.msra.mxu0 0.0
    %1348 = vmatpush.msra.mxu0 0.0
    %1349 = vmatpush.msra.mxu0 0.0
    %1350 = vmatpush.msra.mxu0 0.0
    %1351 = vmatpush.msra.mxu0 0.0
    %1352 = vmatpush.msra.mxu0 %v49
    %1353 = vmatpush.msra.mxu0 %v48
    %1354 = vmatpush.msra.mxu0 %v47
    %1355 = vmatpush.msra.mxu0 %v46
    %1356 = vmatmul.f32.gmra.mxu0 %v1338
    %v1357 = vpop.f32.mrf.mxu0
    %v1358 = vadd.f32 0.0, %v1357
    %1359 = vdwg.mxu0
    %v1360 = vrot.slane %v70, 7
    %v1361 = vrot.slane %v71, 6
    %v1362 = vsel %vm99, %v1361, %v1360
    %v1363 = vsel %vm101, %v1362, 0
    %1365 = vmatpush.msra.mxu0 0.0
    %1366 = vmatpush.msra.mxu0 0.0
    %1367 = vmatpush.msra.mxu0 0.0
    %1368 = vmatpush.msra.mxu0 0.0
    %1369 = vmatpush.msra.mxu0 0.0
    %1370 = vmatpush.msra.mxu0 0.0
    %1371 = vmatpush.msra.mxu0 0.0
    %1372 = vmatpush.msra.mxu0 0.0
    %1373 = vmatpush.msra.mxu0 0.0
    %1374 = vmatpush.msra.mxu0 0.0
    %1375 = vmatpush.msra.mxu0 0.0
    %1376 = vmatpush.msra.mxu0 0.0
    %1377 = vmatpush.msra.mxu0 0.0
    %1378 = vmatpush.msra.mxu0 0.0
    %1379 = vmatpush.msra.mxu0 %v45
    %1380 = vmatpush.msra.mxu0 %v44
    %1381 = vmatmul.f32.gmra.mxu0 %v1363
    %v1382 = vpop.f32.mrf.mxu0
    %v1383 = vadd.f32 %v1358, %v1382
    %1384 = vdwg.mxu0
    %v1385 = vadd.f32 %v1383, %v67
    %v1386 = vxor.u32 %v1385, 2147483648
    %v1387 = vmul.f32 %v1386, 1.442695
    %v1388 = vpow.pop %v1387
    %v1389 = vadd.f32 %v1388, 1.0
    %v1390 = vrcp.pop %v1389
    %v1391 = vmul.f32 %v1389, %v1390
    %v1392 = vsub.f32 1.0, %v1391
    %v1393 = vmul.f32 %v1390, %v1392
    %v1394 = vadd.f32 %v1390, %v1393
    %vm1395 = vweird.f32 %v1389
    %vm1396 = vweird.f32 %v1390
    %vm1397 = vmor %vm1395, %vm1396
    %v1398 = vsel %vm1397, %v1390, %v1394
    %v1399 = vand.u32 2147483647, %v1389
    %vm1400 = vcmp.eq.f32.partialorder %v1399, 8.507059e+37
    %v1401 = vand.u32 %v1389, 2147483648
    %v1402 = vor.u32 1.1754944e-38, %v1401
    %v1403 = vsel %vm1400, %v1402, %v1398
    %v1404 = vmul.f32 1.0, %v1403
    %v1405 = vsub.f32 %v1404, 1.0
    %1407 = vrot.lane.b32.xlu0 %v1385, 32
    %v1408 = vpop.permute.xlu0 %1407
    %v1410 = vmul.f32 %v1405, %v1408
    %1412 = vrot.lane.b32.xlu0 %v1410, 64
    %v1413 = vpop.permute.xlu0 %1412
    %v1415 = vadd.f32 %v1385, %v1413
    %v1416 = vtanh.pop %v1415
    %v1417 = vsub.f32 1.0, %v1404
    %1419 = vrot.lane.b32.xlu0 %v1416, 96
    %v1420 = vpop.permute.xlu0 %1419
    %v1422 = vmul.f32 %v1417, %v1420
    %v1423 = vmul.f32 %v1404, %v1243
    %v1424 = vadd.f32 %v1422, %v1423
    %v1425 = vmax.f32 %v1424, 0.0
    %1427 = vrot.lane.b32.xlu0 %v1334, 96
    %v1428 = vpop.permute.xlu0 %1427
    %v1429 = vsel %vm72, %v1428, 0
    %1431 = vmatpush.msra.mxu0 0.0
    %1432 = vmatpush.msra.mxu0 0.0
    %1433 = vmatpush.msra.mxu0 0.0
    %1434 = vmatpush.msra.mxu0 0.0
    %1435 = vmatpush.msra.mxu0 0.0
    %1436 = vmatpush.msra.mxu0 0.0
    %1437 = vmatpush.msra.mxu0 0.0
    %1438 = vmatpush.msra.mxu0 0.0
    %1439 = vmatpush.msra.mxu0 0.0
    %1440 = vmatpush.msra.mxu0 0.0
    %1441 = vmatpush.msra.mxu0 0.0
    %1442 = vmatpush.msra.mxu0 0.0
    %1443 = vmatpush.msra.mxu0 %v57
    %1444 = vmatpush.msra.mxu0 %v56
    %1445 = vmatpush.msra.mxu0 %v55
    %1446 = vmatpush.msra.mxu0 %v54
    %1447 = vmatmul.f32.gmra.mxu0 %v1429
    %v1448 = vpop.f32.mrf.mxu0
    %v1449 = vadd.f32 0.0, %v1448
    %1450 = vdwg.mxu0
    %1452 = vrot.lane.b32.xlu0 %v1425, 96
    %v1453 = vpop.permute.xlu0 %1452
    %v1454 = vsel %vm72, %v1453, 0
    %1456 = vmatpush.msra.mxu0 0.0
    %1457 = vmatpush.msra.mxu0 0.0
    %1458 = vmatpush.msra.mxu0 0.0
    %1459 = vmatpush.msra.mxu0 0.0
    %1460 = vmatpush.msra.mxu0 0.0
    %1461 = vmatpush.msra.mxu0 0.0
    %1462 = vmatpush.msra.mxu0 0.0
    %1463 = vmatpush.msra.mxu0 0.0
    %1464 = vmatpush.msra.mxu0 0.0
    %1465 = vmatpush.msra.mxu0 0.0
    %1466 = vmatpush.msra.mxu0 0.0
    %1467 = vmatpush.msra.mxu0 0.0
    %1468 = vmatpush.msra.mxu0 %v53
    %1469 = vmatpush.msra.mxu0 %v52
    %1470 = vmatpush.msra.mxu0 %v51
    %1471 = vmatpush.msra.mxu0 %v50
    %1472 = vmatmul.f32.gmra.mxu0 %v1454
    %v1473 = vpop.f32.mrf.mxu0
    %v1474 = vadd.f32 %v1449, %v1473
    %1475 = vdwg.mxu0
    %v1476 = vadd.f32 %v1474, %v69
    %v1477 = vxor.u32 %v1476, 2147483648
    %v1478 = vmul.f32 %v1477, 1.442695
    %v1479 = vpow.pop %v1478
    %v1480 = vadd.f32 %v1479, 1.0
    %v1481 = vrcp.pop %v1480
    %v1482 = vmul.f32 %v1480, %v1481
    %v1483 = vsub.f32 1.0, %v1482
    %v1484 = vmul.f32 %v1481, %v1483
    %v1485 = vadd.f32 %v1481, %v1484
    %vm1486 = vweird.f32 %v1480
    %vm1487 = vweird.f32 %v1481
    %vm1488 = vmor %vm1486, %vm1487
    %v1489 = vsel %vm1488, %v1481, %v1485
    %v1490 = vand.u32 2147483647, %v1480
    %vm1491 = vcmp.eq.f32.partialorder %v1490, 8.507059e+37
    %v1492 = vand.u32 %v1480, 2147483648
    %v1493 = vor.u32 1.1754944e-38, %v1492
    %v1494 = vsel %vm1491, %v1493, %v1489
    %v1495 = vmul.f32 1.0, %v1494
    %v1496 = vsub.f32 %v1495, 1.0
    %1498 = vrot.lane.b32.xlu0 %v1476, 32
    %v1499 = vpop.permute.xlu0 %1498
    %v1501 = vmul.f32 %v1496, %v1499
    %1503 = vrot.lane.b32.xlu0 %v1501, 64
    %v1504 = vpop.permute.xlu0 %1503
    %v1506 = vadd.f32 %v1476, %v1504
    %v1507 = vtanh.pop %v1506
    %v1508 = vsub.f32 1.0, %v1495
    %1510 = vrot.lane.b32.xlu0 %v1507, 96
    %v1511 = vpop.permute.xlu0 %1510
    %v1513 = vmul.f32 %v1508, %v1511
    %v1514 = vmul.f32 %v1495, %v1334
    %v1515 = vadd.f32 %v1513, %v1514
    %v1516 = vmax.f32 %v1515, 0.0
    %v1517 = vperm.slane %v64, 0
    %1519 = vrot.lane.b32.xlu0 %v1516, 96
    %v1520 = vpop.permute.xlu0 %1519
    %v1521 = vsel %vm72, %v1520, 0
    %1523 = vmatpush.msra.mxu0 0.0
    %1524 = vmatpush.msra.mxu0 0.0
    %1525 = vmatpush.msra.mxu0 0.0
    %1526 = vmatpush.msra.mxu0 0.0
    %1527 = vmatpush.msra.mxu0 0.0
    %1528 = vmatpush.msra.mxu0 0.0
    %1529 = vmatpush.msra.mxu0 0.0
    %1530 = vmatpush.msra.mxu0 0.0
    %1531 = vmatpush.msra.mxu0 0.0
    %1532 = vmatpush.msra.mxu0 0.0
    %1533 = vmatpush.msra.mxu0 0.0
    %1534 = vmatpush.msra.mxu0 0.0
    %1535 = vmatpush.msra.mxu0 %v61
    %1536 = vmatpush.msra.mxu0 %v60
    %1537 = vmatpush.msra.mxu0 %v59
    %1538 = vmatpush.msra.mxu0 %v58
    %1539 = vmatmul.f32.gmra.mxu0 %v1521
    %v1540 = vpop.f32.mrf.mxu0
    %v1541 = vadd.f32 %v1517, %v1540
    %1542 = vdwg.mxu0
    %v1543 = vmax.f32 %v1541, 0.0
    %v1544 = vperm.slane %v65, 0
    %v1546 = vsel %vm101, %v1543, 0
    %1548 = vmatpush.msra.mxu0 0.0
    %1549 = vmatpush.msra.mxu0 0.0
    %1550 = vmatpush.msra.mxu0 0.0
    %1551 = vmatpush.msra.mxu0 0.0
    %1552 = vmatpush.msra.mxu0 0.0
    %1553 = vmatpush.msra.mxu0 0.0
    %1554 = vmatpush.msra.mxu0 0.0
    %1555 = vmatpush.msra.mxu0 0.0
    %1556 = vmatpush.msra.mxu0 0.0
    %1557 = vmatpush.msra.mxu0 0.0
    %1558 = vmatpush.msra.mxu0 0.0
    %1559 = vmatpush.msra.mxu0 0.0
    %1560 = vmatpush.msra.mxu0 0.0
    %1561 = vmatpush.msra.mxu0 0.0
    %1562 = vmatpush.msra.mxu0 %v63
    %1563 = vmatpush.msra.mxu0 %v62
    %1564 = vmatmul.f32.gmra.mxu0 %v1546
    %v1565 = vpop.f32.mrf.mxu0
    %v1566 = vadd.f32 %v1544, %v1565
    %1567 = vdwg.mxu0
    %v1568 = vmax.f32 %v1566, 0.0
    %1569 = vst [vmem:[#allocation7] sm:$0x3] %v1568
    // Predicated region
    $region18: #{tpu_custom_call.1} parent=1 // pred_check
      _
    $region19: #{tpu_custom_call.1} parent=1 // pred_check_branch
      %1571 = sbr.rel (0) target = $region21
    $region20: #{tpu_custom_call.1} parent=1 // pred_region
      %1573 = vsyncadd [#allocation4], 0
      %s1575 = sshll.u32 [#allocation7], 4
      %s1576 = int_to_ptr.vmem [resolvable:$true] %s1575
      %s1577 = sshll.u32 %s2, 4
      %s1578 = int_to_ptr.hbm [resolvable:$true] %s1577
      %1580 = dma.vmem_to_hbm [thread:$0]  %s1576, 32, %s1578, [#allocation4]
    $region21: #{tpu_custom_call.1} parent=1 // pred_fallthru
      _
    // Predicated region
    $region22: #{tpu_custom_call.1} parent=1 // pred_check
      _
    $region23: #{tpu_custom_call.1} parent=1 // pred_check_branch
      %1582 = sbr.rel (0) target = $region25
    $region24: #{tpu_custom_call.1} parent=1 // pred_region
      %1584 = dma.done [#allocation4], 32
    $region25: #{tpu_custom_call.1} parent=1 // pred_fallthru
      _
    %1585 = vsyncpa [#allocation3], 1
    %1586 = vsyncpa [#allocation6], 1
    %1587 = vsyncpa [#allocation4], 1

</llo_original>
